<compile_context>
chip_gen: v5e
topology: v5e:2x2
jax: 0.10.0
libtpu: 0.0.40
codegen_flags: <defaults>
</compile_context>

<pallas_src>
import functools

import jax
import jax.numpy as jnp
from jax.experimental import pallas as pl
from jax.experimental.pallas import tpu as pltpu


# ----------------------------------------------------------------------------
# Fused kernel: enc LSTM + dec LSTM + attention + pls, single grid step.
# ----------------------------------------------------------------------------
def _fused_kernel(x_ref, wrec_ref, wattn_ref, bias_ref, hc0_ref, wdc_ref,
                  out_ref, *, B, Te, Td, H, C, Os, r):
    f32, bf16 = jnp.float32, jnp.bfloat16

    # ---- unpack the packed parameter slabs (static sub-tile loads). ----
    wih_e = wrec_ref[0:C, :]                        # [C,4H]  bf16
    wih_d = wrec_ref[C:2 * C, :]                    # [C,4H]  bf16
    whh_e = wrec_ref[2 * C:2 * C + H, :]            # [H,4H]  bf16
    whh_d = wrec_ref[2 * C + H:2 * C + 2 * H, :]    # [H,4H]  bf16
    b_e = bias_ref[0:1, :]                          # [1,4H]  f32
    b_d = bias_ref[1:2, :]                          # [1,4H]  f32
    b_attn = bias_ref[2:3, 0:H]                     # [1,H]   f32
    b_pls = bias_ref[3:4, 0:1]                      # [1,1]   f32
    h0 = hc0_ref[0:B, :]                            # [B,H]   f32
    c0 = hc0_ref[B:2 * B, :]                        # [B,H]   f32
    wd = wdc_ref[0:Td, :]                           # [Td,H]  f32
    wc = wdc_ref[Td:2 * Td, :]                      # [Td,H]  f32

    x_all = x_ref[...]                              # [(Te+Td)*B, C] bf16 (time-major)

    # ---- hoisted LSTM input projections: one MXU call per LSTM. ----
    xpe = jnp.dot(x_all[0:Te * B, :], wih_e,
                  preferred_element_type=f32) + b_e                  # [Te*B,4H]
    xpd = jnp.dot(x_all[Te * B:(Te + Td) * B, :], wih_d,
                  preferred_element_type=f32) + b_d                  # [Td*B,4H]

    def run_lstm(xp, whh_bf, h, c, T):
        # Fully unrolled recurrence; h/c stay f32 in vregs, per-step h kept in
        # a python list (no per-row VMEM stores on the serial path).
        hs = []
        for t in range(T):
            g = xp[t * B:(t + 1) * B, :] + jnp.dot(
                h.astype(bf16), whh_bf, preferred_element_type=f32)  # [B,4H]
            sg = jax.nn.sigmoid(g)            # one EUP pass over the full gate vreg
            tg = jnp.tanh(g[:, 2 * H:3 * H])  # tanh only on the g slice
            c = sg[:, H:2 * H] * c + sg[:, 0:H] * tg
            h = sg[:, 3 * H:4 * H] * jnp.tanh(c)
            hs.append(h)
        return h, c, hs

    h, c, hs_e = run_lstm(xpe, whh_e, h0, c0, Te)    # encoder
    _, _, hs_d = run_lstm(xpd, whh_d, h, c, Td)      # decoder (carries enc hidden)

    # ---- materialize batch-major [B*T, H] activation stacks once (in vregs). ----
    enc_hs = jnp.concatenate(
        [hs_e[t][b:b + 1, :] for b in range(B) for t in range(Te)], axis=0)
    dec_hs = jnp.concatenate(
        [hs_d[t][b:b + 1, :] for b in range(B) for t in range(Td)], axis=0)

    # ---- attention projection for all B*Te rows in a single matmul. ----
    enc_a = jnp.dot(enc_hs.astype(bf16), wattn_ref[...],
                    preferred_element_type=f32) + b_attn             # [B*Te,H]
    enc_a_bf = enc_a.astype(bf16)
    dec_bf = dec_hs.astype(bf16)

    # 0/1 group-sum matrix [Td,Os] built in-kernel (no extra DMA, no int div).
    ri = jax.lax.broadcasted_iota(jnp.int32, (Td, Os), 0)
    ci = jax.lax.broadcasted_iota(jnp.int32, (Td, Os), 1)
    gmat = ((ri >= ci * r) & (ri < (ci + 1) * r)).astype(f32)

    outs = []
    for b in range(B):
        ea = enc_a_bf[b * Te:(b + 1) * Te, :]        # [Te,H] (tile-aligned slice)
        db = dec_bf[b * Td:(b + 1) * Td, :]          # [Td,H]
        # scores = dec @ enc_a^T via dot_general contracting H on both sides.
        sc = jax.lax.dot_general(db, ea, (((1,), (1,)), ((), ())),
                                 preferred_element_type=f32)         # [Td,Te]
        m = jnp.max(sc, axis=-1, keepdims=True)
        e = jnp.exp(sc - m)
        aw = e * pl.reciprocal(jnp.sum(e, axis=-1, keepdims=True), approx=True)
        ctx = jnp.dot(aw.astype(bf16), ea, preferred_element_type=f32)  # [Td,H]
        # pls tail: row-wise weighted reduce + group-sum (no concat/reshape/N=1 MXU).
        s = jnp.sum(dec_hs[b * Td:(b + 1) * Td, :] * wd + ctx * wc,
                    axis=-1, keepdims=True)                          # [Td,1]
        outs.append(jnp.sum(s * gmat, axis=0, keepdims=True))        # [1,Os]

    # lane-slab output [1, B*Os]; reshaped to [B, Os, 1] in the wrapper.
    out_ref[...] = jnp.concatenate(outs, axis=1) + b_pls


# ----------------------------------------------------------------------------
# Full module forward (matches Attention.forward).
# ----------------------------------------------------------------------------
def attention_module_forward(params, enc_inputs, hidden, dec_inputs, output_size):
    h0, c0 = hidden                  # each [1, B, H] (PyTorch LSTM convention)
    h0 = h0[0]
    c0 = c0[0]
    B, Te, C = enc_inputs.shape
    _, Td, _ = dec_inputs.shape
    H = h0.shape[-1]
    assert Td % output_size == 0, "this kernel assumes Td divisible by Output_size"
    r = Td // output_size
    f32, bf16 = jnp.float32, jnp.bfloat16

    # time-major flattened inputs (row = t*B + b), enc block then dec block.
    enc_x = jnp.transpose(enc_inputs, (1, 0, 2)).reshape(Te * B, C)
    dec_x = jnp.transpose(dec_inputs, (1, 0, 2)).reshape(Td * B, C)
    x_all = jnp.concatenate([enc_x, dec_x], axis=0).astype(bf16)     # [(Te+Td)*B, C]

    # recurrent weight slab [2C+2H, 4H] bf16: wih_e | wih_d | whh_e | whh_d
    w_rec = jnp.concatenate([
        jnp.transpose(params["enc_w_ih"]), jnp.transpose(params["dec_w_ih"]),
        jnp.transpose(params["enc_w_hh"]), jnp.transpose(params["dec_w_hh"]),
    ], axis=0).astype(bf16)
    w_attn = jnp.transpose(params["attn_w"]).astype(bf16)            # [H, H]

    # bias slab [4, 4H] f32: enc gate bias | dec gate bias | [attn_b|0] | [pls_b|0]
    b_e = (params["enc_b_ih"] + params["enc_b_hh"]).reshape(1, 4 * H)
    b_d = (params["dec_b_ih"] + params["dec_b_hh"]).reshape(1, 4 * H)
    b_attn = jnp.zeros((1, 4 * H), f32).at[0, :H].set(params["attn_b"])
    b_pls = jnp.zeros((1, 4 * H), f32).at[0, 0].set(params["pls_b"][0])
    bias_slab = jnp.concatenate([b_e, b_d, b_attn, b_pls], axis=0).astype(f32)

    hc0 = jnp.concatenate([h0, c0], axis=0).astype(f32)              # [2B, H]

    # pls Linear [1, K] (K = r*2H) rearranged into per-time-row dec/ctx weights,
    # replicating cat+view+Linear exactly (group-sum matrix is built in-kernel).
    w2 = params["pls_w"].reshape(r, 2 * H)
    w_dc = jnp.concatenate([jnp.tile(w2[:, :H], (output_size, 1)),
                            jnp.tile(w2[:, H:], (output_size, 1))],
                           axis=0).astype(f32)                       # [2Td, H]

    ins = (x_all, w_rec, w_attn, bias_slab, hc0, w_dc)

    def full(shape):
        return pl.BlockSpec(shape, lambda i: (0,) * len(shape))

    flops = int(2 * (Te + Td) * B * 4 * H * (C + H)   # input proj + recurrence
                + 2 * B * Te * H * H                  # attention projection
                + 4 * B * Td * Te * H                 # scores + context
                + 4 * B * Td * H)                     # pls tail
    transcendentals = int((Te + Td) * B * 6 * H + B * Td * Te)
    bytes_accessed = int(sum(a.size * a.dtype.itemsize for a in ins)
                         + B * output_size * 4)

    kern = functools.partial(_fused_kernel, B=B, Te=Te, Td=Td, H=H, C=C,
                             Os=output_size, r=r)
    out = pl.pallas_call(
        kern,
        out_shape=jax.ShapeDtypeStruct((1, B * output_size), jnp.float32),
        grid_spec=pltpu.PrefetchScalarGridSpec(
            num_scalar_prefetch=0,
            grid=(1,),
            in_specs=[full(a.shape) for a in ins],
            out_specs=full((1, B * output_size))),
        compiler_params=pltpu.CompilerParams(
            dimension_semantics=("arbitrary",)),
        cost_estimate=pl.CostEstimate(flops=flops,
                                      transcendentals=transcendentals,
                                      bytes_accessed=bytes_accessed),
    )(*ins)

    # NOTE: dropout=0.5 on a single-layer nn.LSTM is a no-op (and inference mode).
    trained_attn = []   # module always returns an empty python list
    return out.reshape(B, output_size, 1), trained_attn


# ----------------------------------------------------------------------------
# Pure-JAX reference for correctness checking.
# ----------------------------------------------------------------------------
def _lstm_ref(x_tbc, w_ih, w_hh, b_ih, b_hh, h0, c0):
    def step(carry, x):
        h, c = carry
        gates = x @ w_ih.T + h @ w_hh.T + b_ih + b_hh
        i, f, g, o = jnp.split(gates, 4, axis=-1)
        c = jax.nn.sigmoid(f) * c + jax.nn.sigmoid(i) * jnp.tanh(g)
        h = jax.nn.sigmoid(o) * jnp.tanh(c)
        return (h, c), h
    (hT, cT), outs = jax.lax.scan(step, (h0, c0), x_tbc)
    return outs, hT, cT


def _reference_forward(params, enc_inputs, hidden, dec_inputs, output_size):
    h0, c0 = hidden
    h0, c0 = h0[0], c0[0]
    enc_t = jnp.transpose(enc_inputs, (1, 0, 2))
    dec_t = jnp.transpose(dec_inputs, (1, 0, 2))
    enc_out, h_e, c_e = _lstm_ref(enc_t, params["enc_w_ih"], params["enc_w_hh"],
                                  params["enc_b_ih"], params["enc_b_hh"], h0, c0)
    dec_out, _, _ = _lstm_ref(dec_t, params["dec_w_ih"], params["dec_w_hh"],
                              params["dec_b_ih"], params["dec_b_hh"], h_e, c_e)
    enc_out = jnp.transpose(enc_out, (1, 0, 2))
    dec_out = jnp.transpose(dec_out, (1, 0, 2))
    enc_a = enc_out @ params["attn_w"].T + params["attn_b"]
    scores = jnp.einsum("bqh,bkh->bqk", dec_out, enc_a)
    w = jax.nn.softmax(scores, axis=-1)
    ctx = jnp.einsum("bqk,bkh->bqh", w, enc_a)
    comb = jnp.concatenate([dec_out, ctx], axis=-1)
    B = comb.shape[0]
    comb = comb.reshape(B, output_size, -1)
    return comb @ params["pls_w"].T + params["pls_b"]


# ----------------------------------------------------------------------------
# Deterministic parameter init (PyTorch-style uniform ranges, synthetic).
# ----------------------------------------------------------------------------
def init_params(key, n_class, hidden, dec_seq, output_size):
    K = (dec_seq * 2 * hidden) // output_size
    ks = jax.random.split(key, 12)
    klstm = 1.0 / jnp.sqrt(hidden)
    u = lambda k, shape, s: jax.random.uniform(k, shape, jnp.float32, -s, s)
    return {
        "enc_w_ih": u(ks[0], (4 * hidden, n_class), klstm),
        "enc_w_hh": u(ks[1], (4 * hidden, hidden), klstm),
        "enc_b_ih": u(ks[2], (4 * hidden,), klstm),
        "enc_b_hh": u(ks[3], (4 * hidden,), klstm),
        "dec_w_ih": u(ks[4], (4 * hidden, n_class), klstm),
        "dec_w_hh": u(ks[5], (4 * hidden, hidden), klstm),
        "dec_b_ih": u(ks[6], (4 * hidden,), klstm),
        "dec_b_hh": u(ks[7], (4 * hidden,), klstm),
        "attn_w": u(ks[8], (hidden, hidden), 1.0 / jnp.sqrt(hidden)),
        "attn_b": u(ks[9], (hidden,), 1.0 / jnp.sqrt(hidden)),
        "pls_w": u(ks[10], (1, K), 1.0 / jnp.sqrt(K)),
        "pls_b": u(ks[11], (1,), 1.0 / jnp.sqrt(K)),
    }


if __name__ == "__main__":
    B, Te, Td = 2, 8, 8
    n_class, hidden = 8, 32
    output_size = 4          # Output_size; combine -> [B, 4, (8*64)/4=128]

    key = jax.random.PRNGKey(0)
    kp, k1, k2, k3, k4 = jax.random.split(key, 5)
    params = init_params(kp, n_class, hidden, Td, output_size)

    enc_inputs = jax.random.normal(k1, (B, Te, n_class), jnp.float32)
    dec_inputs = jax.random.normal(k2, (B, Td, n_class), jnp.float32)
    h0 = jax.random.normal(k3, (1, B, hidden), jnp.float32)
    c0 = jax.random.normal(k4, (1, B, hidden), jnp.float32)

    out, trained_attn = attention_module_forward(
        params, enc_inputs, (h0, c0), dec_inputs, output_size)
    out = jax.block_until_ready(out)
    assert out.shape == (B, output_size, 1), out.shape

    ref = _reference_forward(params, enc_inputs, (h0, c0), dec_inputs, output_size)
    ref = jax.block_until_ready(ref)
    assert jnp.allclose(out, ref, rtol=1e-2, atol=1e-2), (
        f"max abs diff {jnp.max(jnp.abs(out - ref))}")

    print("KERNEL_OK")
</pallas_src>

<mosaic_0001>
module attributes {stable_mosaic.version = 11 : i64} {
  func.func @_fused_kernel(%arg0: i32, %arg1: memref<32x8xbf16, #tpu.memory_space<vmem>>, %arg2: memref<80x128xbf16, #tpu.memory_space<vmem>>, %arg3: memref<32x32xbf16, #tpu.memory_space<vmem>>, %arg4: memref<4x128xf32, #tpu.memory_space<vmem>>, %arg5: memref<4x32xf32, #tpu.memory_space<vmem>>, %arg6: memref<16x32xf32, #tpu.memory_space<vmem>>, %arg7: memref<1x8xf32, #tpu.memory_space<vmem>>) attributes {dimension_semantics = [#tpu.dimension_semantics<arbitrary>], iteration_bounds = array<i64: 1>, scalar_prefetch = 0 : i64, scratch_operands = 0 : i64, tpu.core_type = #tpu.core_type<tc>, window_params = [{pipeline_mode = #tpu.pipeline_mode<synchronous>, transform_indices = @transform_0, window_bounds = array<i64: 32, 8>}, {pipeline_mode = #tpu.pipeline_mode<synchronous>, transform_indices = @transform_1, window_bounds = array<i64: 80, 128>}, {pipeline_mode = #tpu.pipeline_mode<synchronous>, transform_indices = @transform_2, window_bounds = array<i64: 32, 32>}, {pipeline_mode = #tpu.pipeline_mode<synchronous>, transform_indices = @transform_3, window_bounds = array<i64: 4, 128>}, {pipeline_mode = #tpu.pipeline_mode<synchronous>, transform_indices = @transform_4, window_bounds = array<i64: 4, 32>}, {pipeline_mode = #tpu.pipeline_mode<synchronous>, transform_indices = @transform_5, window_bounds = array<i64: 16, 32>}, {pipeline_mode = #tpu.pipeline_mode<synchronous>, transform_indices = @transform_6, window_bounds = array<i64: 1, 8>}]} {
    %c0 = arith.constant 0 : index
    %c0_0 = arith.constant 0 : index
    %0 = vector.load %arg2[%c0, %c0_0] : memref<80x128xbf16, #tpu.memory_space<vmem>>, vector<8x128xbf16>
    %c8 = arith.constant 8 : index
    %c0_1 = arith.constant 0 : index
    %1 = vector.load %arg2[%c8, %c0_1] : memref<80x128xbf16, #tpu.memory_space<vmem>>, vector<8x128xbf16>
    %c16 = arith.constant 16 : index
    %c0_2 = arith.constant 0 : index
    %2 = vector.load %arg2[%c16, %c0_2] : memref<80x128xbf16, #tpu.memory_space<vmem>>, vector<32x128xbf16>
    %c48 = arith.constant 48 : index
    %c0_3 = arith.constant 0 : index
    %3 = vector.load %arg2[%c48, %c0_3] : memref<80x128xbf16, #tpu.memory_space<vmem>>, vector<32x128xbf16>
    %c0_4 = arith.constant 0 : index
    %c0_5 = arith.constant 0 : index
    %4 = vector.load %arg4[%c0_4, %c0_5] : memref<4x128xf32, #tpu.memory_space<vmem>>, vector<1x128xf32>
    %c1 = arith.constant 1 : index
    %c0_6 = arith.constant 0 : index
    %5 = vector.load %arg4[%c1, %c0_6] : memref<4x128xf32, #tpu.memory_space<vmem>>, vector<1x128xf32>
    %c2 = arith.constant 2 : index
    %c0_7 = arith.constant 0 : index
    %6 = vector.load %arg4[%c2, %c0_7] : memref<4x128xf32, #tpu.memory_space<vmem>>, vector<1x32xf32>
    %c3 = arith.constant 3 : index
    %c0_8 = arith.constant 0 : index
    %7 = vector.load %arg4[%c3, %c0_8] : memref<4x128xf32, #tpu.memory_space<vmem>>, vector<1x1xf32>
    %c0_9 = arith.constant 0 : index
    %c0_10 = arith.constant 0 : index
    %8 = vector.load %arg5[%c0_9, %c0_10] : memref<4x32xf32, #tpu.memory_space<vmem>>, vector<2x32xf32>
    %c2_11 = arith.constant 2 : index
    %c0_12 = arith.constant 0 : index
    %9 = vector.load %arg5[%c2_11, %c0_12] : memref<4x32xf32, #tpu.memory_space<vmem>>, vector<2x32xf32>
    %c0_13 = arith.constant 0 : index
    %c0_14 = arith.constant 0 : index
    %10 = vector.load %arg6[%c0_13, %c0_14] : memref<16x32xf32, #tpu.memory_space<vmem>>, vector<8x32xf32>
    %c8_15 = arith.constant 8 : index
    %c0_16 = arith.constant 0 : index
    %11 = vector.load %arg6[%c8_15, %c0_16] : memref<16x32xf32, #tpu.memory_space<vmem>>, vector<8x32xf32>
    %c0_17 = arith.constant 0 : index
    %c0_18 = arith.constant 0 : index
    %12 = vector.load %arg1[%c0_17, %c0_18] : memref<32x8xbf16, #tpu.memory_space<vmem>>, vector<32x8xbf16>
    %13 = vector.extract_strided_slice %12 {offsets = [0, 0], sizes = [16, 8], strides = [1, 1]} : vector<32x8xbf16> to vector<16x8xbf16>
    %cst = arith.constant dense<0.000000e+00> : vector<16x128xf32>
    %14 = tpu.matmul %13, %0, %cst {dimension_numbers = #tpu.dot_dimension_numbers<[1], [0], [0], [1], [0, 0, 1, 1], [], []>} : vector<16x8xbf16>, vector<8x128xbf16>, vector<16x128xf32> -> vector<16x128xf32>
    %15 = vector.broadcast %4 : vector<1x128xf32> to vector<16x128xf32>
    %16 = arith.addf %14, %15 : vector<16x128xf32>
    %17 = vector.extract_strided_slice %12 {offsets = [16, 0], sizes = [16, 8], strides = [1, 1]} : vector<32x8xbf16> to vector<16x8xbf16>
    %cst_19 = arith.constant dense<0.000000e+00> : vector<16x128xf32>
    %18 = tpu.matmul %17, %1, %cst_19 {dimension_numbers = #tpu.dot_dimension_numbers<[1], [0], [0], [1], [0, 0, 1, 1], [], []>} : vector<16x8xbf16>, vector<8x128xbf16>, vector<16x128xf32> -> vector<16x128xf32>
    %19 = vector.broadcast %5 : vector<1x128xf32> to vector<16x128xf32>
    %20 = arith.addf %18, %19 : vector<16x128xf32>
    %21 = vector.extract_strided_slice %16 {offsets = [0, 0], sizes = [2, 128], strides = [1, 1]} : vector<16x128xf32> to vector<2x128xf32>
    %22 = arith.truncf %8 : vector<2x32xf32> to vector<2x32xbf16>
    %cst_20 = arith.constant dense<0.000000e+00> : vector<2x128xf32>
    %23 = tpu.matmul %22, %2, %cst_20 {dimension_numbers = #tpu.dot_dimension_numbers<[1], [0], [0], [1], [0, 0, 1, 1], [], []>} : vector<2x32xbf16>, vector<32x128xbf16>, vector<2x128xf32> -> vector<2x128xf32>
    %24 = arith.addf %21, %23 : vector<2x128xf32>
    %25 = arith.negf %24 : vector<2x128xf32>
    %26 = math.exp %25 : vector<2x128xf32>
    %cst_21 = arith.constant 1.000000e+00 : f32
    %27 = vector.broadcast %cst_21 : f32 to vector<2x128xf32>
    %28 = arith.addf %27, %26 : vector<2x128xf32>
    %29 = arith.divf %27, %28 : vector<2x128xf32>
    %30 = vector.extract_strided_slice %24 {offsets = [0, 64], sizes = [2, 32], strides = [1, 1]} : vector<2x128xf32> to vector<2x32xf32>
    %31 = math.tanh %30 : vector<2x32xf32>
    %32 = vector.extract_strided_slice %29 {offsets = [0, 32], sizes = [2, 32], strides = [1, 1]} : vector<2x128xf32> to vector<2x32xf32>
    %33 = arith.mulf %32, %9 : vector<2x32xf32>
    %34 = vector.extract_strided_slice %29 {offsets = [0, 0], sizes = [2, 32], strides = [1, 1]} : vector<2x128xf32> to vector<2x32xf32>
    %35 = arith.mulf %34, %31 : vector<2x32xf32>
    %36 = arith.addf %33, %35 : vector<2x32xf32>
    %37 = vector.extract_strided_slice %29 {offsets = [0, 96], sizes = [2, 32], strides = [1, 1]} : vector<2x128xf32> to vector<2x32xf32>
    %38 = math.tanh %36 : vector<2x32xf32>
    %39 = arith.mulf %37, %38 : vector<2x32xf32>
    %40 = vector.extract_strided_slice %16 {offsets = [2, 0], sizes = [2, 128], strides = [1, 1]} : vector<16x128xf32> to vector<2x128xf32>
    %41 = arith.truncf %39 : vector<2x32xf32> to vector<2x32xbf16>
    %cst_22 = arith.constant dense<0.000000e+00> : vector<2x128xf32>
    %42 = tpu.matmul %41, %2, %cst_22 {dimension_numbers = #tpu.dot_dimension_numbers<[1], [0], [0], [1], [0, 0, 1, 1], [], []>} : vector<2x32xbf16>, vector<32x128xbf16>, vector<2x128xf32> -> vector<2x128xf32>
    %43 = arith.addf %40, %42 : vector<2x128xf32>
    %44 = arith.negf %43 : vector<2x128xf32>
    %45 = math.exp %44 : vector<2x128xf32>
    %cst_23 = arith.constant 1.000000e+00 : f32
    %46 = vector.broadcast %cst_23 : f32 to vector<2x128xf32>
    %47 = arith.addf %46, %45 : vector<2x128xf32>
    %48 = arith.divf %46, %47 : vector<2x128xf32>
    %49 = vector.extract_strided_slice %43 {offsets = [0, 64], sizes = [2, 32], strides = [1, 1]} : vector<2x128xf32> to vector<2x32xf32>
    %50 = math.tanh %49 : vector<2x32xf32>
    %51 = vector.extract_strided_slice %48 {offsets = [0, 32], sizes = [2, 32], strides = [1, 1]} : vector<2x128xf32> to vector<2x32xf32>
    %52 = arith.mulf %51, %36 : vector<2x32xf32>
    %53 = vector.extract_strided_slice %48 {offsets = [0, 0], sizes = [2, 32], strides = [1, 1]} : vector<2x128xf32> to vector<2x32xf32>
    %54 = arith.mulf %53, %50 : vector<2x32xf32>
    %55 = arith.addf %52, %54 : vector<2x32xf32>
    %56 = vector.extract_strided_slice %48 {offsets = [0, 96], sizes = [2, 32], strides = [1, 1]} : vector<2x128xf32> to vector<2x32xf32>
    %57 = math.tanh %55 : vector<2x32xf32>
    %58 = arith.mulf %56, %57 : vector<2x32xf32>
    %59 = vector.extract_strided_slice %16 {offsets = [4, 0], sizes = [2, 128], strides = [1, 1]} : vector<16x128xf32> to vector<2x128xf32>
    %60 = arith.truncf %58 : vector<2x32xf32> to vector<2x32xbf16>
    %cst_24 = arith.constant dense<0.000000e+00> : vector<2x128xf32>
    %61 = tpu.matmul %60, %2, %cst_24 {dimension_numbers = #tpu.dot_dimension_numbers<[1], [0], [0], [1], [0, 0, 1, 1], [], []>} : vector<2x32xbf16>, vector<32x128xbf16>, vector<2x128xf32> -> vector<2x128xf32>
    %62 = arith.addf %59, %61 : vector<2x128xf32>
    %63 = arith.negf %62 : vector<2x128xf32>
    %64 = math.exp %63 : vector<2x128xf32>
    %cst_25 = arith.constant 1.000000e+00 : f32
    %65 = vector.broadcast %cst_25 : f32 to vector<2x128xf32>
    %66 = arith.addf %65, %64 : vector<2x128xf32>
    %67 = arith.divf %65, %66 : vector<2x128xf32>
    %68 = vector.extract_strided_slice %62 {offsets = [0, 64], sizes = [2, 32], strides = [1, 1]} : vector<2x128xf32> to vector<2x32xf32>
    %69 = math.tanh %68 : vector<2x32xf32>
    %70 = vector.extract_strided_slice %67 {offsets = [0, 32], sizes = [2, 32], strides = [1, 1]} : vector<2x128xf32> to vector<2x32xf32>
    %71 = arith.mulf %70, %55 : vector<2x32xf32>
    %72 = vector.extract_strided_slice %67 {offsets = [0, 0], sizes = [2, 32], strides = [1, 1]} : vector<2x128xf32> to vector<2x32xf32>
    %73 = arith.mulf %72, %69 : vector<2x32xf32>
    %74 = arith.addf %71, %73 : vector<2x32xf32>
    %75 = vector.extract_strided_slice %67 {offsets = [0, 96], sizes = [2, 32], strides = [1, 1]} : vector<2x128xf32> to vector<2x32xf32>
    %76 = math.tanh %74 : vector<2x32xf32>
    %77 = arith.mulf %75, %76 : vector<2x32xf32>
    %78 = vector.extract_strided_slice %16 {offsets = [6, 0], sizes = [2, 128], strides = [1, 1]} : vector<16x128xf32> to vector<2x128xf32>
    %79 = arith.truncf %77 : vector<2x32xf32> to vector<2x32xbf16>
    %cst_26 = arith.constant dense<0.000000e+00> : vector<2x128xf32>
    %80 = tpu.matmul %79, %2, %cst_26 {dimension_numbers = #tpu.dot_dimension_numbers<[1], [0], [0], [1], [0, 0, 1, 1], [], []>} : vector<2x32xbf16>, vector<32x128xbf16>, vector<2x128xf32> -> vector<2x128xf32>
    %81 = arith.addf %78, %80 : vector<2x128xf32>
    %82 = arith.negf %81 : vector<2x128xf32>
    %83 = math.exp %82 : vector<2x128xf32>
    %cst_27 = arith.constant 1.000000e+00 : f32
    %84 = vector.broadcast %cst_27 : f32 to vector<2x128xf32>
    %85 = arith.addf %84, %83 : vector<2x128xf32>
    %86 = arith.divf %84, %85 : vector<2x128xf32>
    %87 = vector.extract_strided_slice %81 {offsets = [0, 64], sizes = [2, 32], strides = [1, 1]} : vector<2x128xf32> to vector<2x32xf32>
    %88 = math.tanh %87 : vector<2x32xf32>
    %89 = vector.extract_strided_slice %86 {offsets = [0, 32], sizes = [2, 32], strides = [1, 1]} : vector<2x128xf32> to vector<2x32xf32>
    %90 = arith.mulf %89, %74 : vector<2x32xf32>
    %91 = vector.extract_strided_slice %86 {offsets = [0, 0], sizes = [2, 32], strides = [1, 1]} : vector<2x128xf32> to vector<2x32xf32>
    %92 = arith.mulf %91, %88 : vector<2x32xf32>
    %93 = arith.addf %90, %92 : vector<2x32xf32>
    %94 = vector.extract_strided_slice %86 {offsets = [0, 96], sizes = [2, 32], strides = [1, 1]} : vector<2x128xf32> to vector<2x32xf32>
    %95 = math.tanh %93 : vector<2x32xf32>
    %96 = arith.mulf %94, %95 : vector<2x32xf32>
    %97 = vector.extract_strided_slice %16 {offsets = [8, 0], sizes = [2, 128], strides = [1, 1]} : vector<16x128xf32> to vector<2x128xf32>
    %98 = arith.truncf %96 : vector<2x32xf32> to vector<2x32xbf16>
    %cst_28 = arith.constant dense<0.000000e+00> : vector<2x128xf32>
    %99 = tpu.matmul %98, %2, %cst_28 {dimension_numbers = #tpu.dot_dimension_numbers<[1], [0], [0], [1], [0, 0, 1, 1], [], []>} : vector<2x32xbf16>, vector<32x128xbf16>, vector<2x128xf32> -> vector<2x128xf32>
    %100 = arith.addf %97, %99 : vector<2x128xf32>
    %101 = arith.negf %100 : vector<2x128xf32>
    %102 = math.exp %101 : vector<2x128xf32>
    %cst_29 = arith.constant 1.000000e+00 : f32
    %103 = vector.broadcast %cst_29 : f32 to vector<2x128xf32>
    %104 = arith.addf %103, %102 : vector<2x128xf32>
    %105 = arith.divf %103, %104 : vector<2x128xf32>
    %106 = vector.extract_strided_slice %100 {offsets = [0, 64], sizes = [2, 32], strides = [1, 1]} : vector<2x128xf32> to vector<2x32xf32>
    %107 = math.tanh %106 : vector<2x32xf32>
    %108 = vector.extract_strided_slice %105 {offsets = [0, 32], sizes = [2, 32], strides = [1, 1]} : vector<2x128xf32> to vector<2x32xf32>
    %109 = arith.mulf %108, %93 : vector<2x32xf32>
    %110 = vector.extract_strided_slice %105 {offsets = [0, 0], sizes = [2, 32], strides = [1, 1]} : vector<2x128xf32> to vector<2x32xf32>
    %111 = arith.mulf %110, %107 : vector<2x32xf32>
    %112 = arith.addf %109, %111 : vector<2x32xf32>
    %113 = vector.extract_strided_slice %105 {offsets = [0, 96], sizes = [2, 32], strides = [1, 1]} : vector<2x128xf32> to vector<2x32xf32>
    %114 = math.tanh %112 : vector<2x32xf32>
    %115 = arith.mulf %113, %114 : vector<2x32xf32>
    %116 = vector.extract_strided_slice %16 {offsets = [10, 0], sizes = [2, 128], strides = [1, 1]} : vector<16x128xf32> to vector<2x128xf32>
    %117 = arith.truncf %115 : vector<2x32xf32> to vector<2x32xbf16>
    %cst_30 = arith.constant dense<0.000000e+00> : vector<2x128xf32>
    %118 = tpu.matmul %117, %2, %cst_30 {dimension_numbers = #tpu.dot_dimension_numbers<[1], [0], [0], [1], [0, 0, 1, 1], [], []>} : vector<2x32xbf16>, vector<32x128xbf16>, vector<2x128xf32> -> vector<2x128xf32>
    %119 = arith.addf %116, %118 : vector<2x128xf32>
    %120 = arith.negf %119 : vector<2x128xf32>
    %121 = math.exp %120 : vector<2x128xf32>
    %cst_31 = arith.constant 1.000000e+00 : f32
    %122 = vector.broadcast %cst_31 : f32 to vector<2x128xf32>
    %123 = arith.addf %122, %121 : vector<2x128xf32>
    %124 = arith.divf %122, %123 : vector<2x128xf32>
    %125 = vector.extract_strided_slice %119 {offsets = [0, 64], sizes = [2, 32], strides = [1, 1]} : vector<2x128xf32> to vector<2x32xf32>
    %126 = math.tanh %125 : vector<2x32xf32>
    %127 = vector.extract_strided_slice %124 {offsets = [0, 32], sizes = [2, 32], strides = [1, 1]} : vector<2x128xf32> to vector<2x32xf32>
    %128 = arith.mulf %127, %112 : vector<2x32xf32>
    %129 = vector.extract_strided_slice %124 {offsets = [0, 0], sizes = [2, 32], strides = [1, 1]} : vector<2x128xf32> to vector<2x32xf32>
    %130 = arith.mulf %129, %126 : vector<2x32xf32>
    %131 = arith.addf %128, %130 : vector<2x32xf32>
    %132 = vector.extract_strided_slice %124 {offsets = [0, 96], sizes = [2, 32], strides = [1, 1]} : vector<2x128xf32> to vector<2x32xf32>
    %133 = math.tanh %131 : vector<2x32xf32>
    %134 = arith.mulf %132, %133 : vector<2x32xf32>
    %135 = vector.extract_strided_slice %16 {offsets = [12, 0], sizes = [2, 128], strides = [1, 1]} : vector<16x128xf32> to vector<2x128xf32>
    %136 = arith.truncf %134 : vector<2x32xf32> to vector<2x32xbf16>
    %cst_32 = arith.constant dense<0.000000e+00> : vector<2x128xf32>
    %137 = tpu.matmul %136, %2, %cst_32 {dimension_numbers = #tpu.dot_dimension_numbers<[1], [0], [0], [1], [0, 0, 1, 1], [], []>} : vector<2x32xbf16>, vector<32x128xbf16>, vector<2x128xf32> -> vector<2x128xf32>
    %138 = arith.addf %135, %137 : vector<2x128xf32>
    %139 = arith.negf %138 : vector<2x128xf32>
    %140 = math.exp %139 : vector<2x128xf32>
    %cst_33 = arith.constant 1.000000e+00 : f32
    %141 = vector.broadcast %cst_33 : f32 to vector<2x128xf32>
    %142 = arith.addf %141, %140 : vector<2x128xf32>
    %143 = arith.divf %141, %142 : vector<2x128xf32>
    %144 = vector.extract_strided_slice %138 {offsets = [0, 64], sizes = [2, 32], strides = [1, 1]} : vector<2x128xf32> to vector<2x32xf32>
    %145 = math.tanh %144 : vector<2x32xf32>
    %146 = vector.extract_strided_slice %143 {offsets = [0, 32], sizes = [2, 32], strides = [1, 1]} : vector<2x128xf32> to vector<2x32xf32>
    %147 = arith.mulf %146, %131 : vector<2x32xf32>
    %148 = vector.extract_strided_slice %143 {offsets = [0, 0], sizes = [2, 32], strides = [1, 1]} : vector<2x128xf32> to vector<2x32xf32>
    %149 = arith.mulf %148, %145 : vector<2x32xf32>
    %150 = arith.addf %147, %149 : vector<2x32xf32>
    %151 = vector.extract_strided_slice %143 {offsets = [0, 96], sizes = [2, 32], strides = [1, 1]} : vector<2x128xf32> to vector<2x32xf32>
    %152 = math.tanh %150 : vector<2x32xf32>
    %153 = arith.mulf %151, %152 : vector<2x32xf32>
    %154 = vector.extract_strided_slice %16 {offsets = [14, 0], sizes = [2, 128], strides = [1, 1]} : vector<16x128xf32> to vector<2x128xf32>
    %155 = arith.truncf %153 : vector<2x32xf32> to vector<2x32xbf16>
    %cst_34 = arith.constant dense<0.000000e+00> : vector<2x128xf32>
    %156 = tpu.matmul %155, %2, %cst_34 {dimension_numbers = #tpu.dot_dimension_numbers<[1], [0], [0], [1], [0, 0, 1, 1], [], []>} : vector<2x32xbf16>, vector<32x128xbf16>, vector<2x128xf32> -> vector<2x128xf32>
    %157 = arith.addf %154, %156 : vector<2x128xf32>
    %158 = arith.negf %157 : vector<2x128xf32>
    %159 = math.exp %158 : vector<2x128xf32>
    %cst_35 = arith.constant 1.000000e+00 : f32
    %160 = vector.broadcast %cst_35 : f32 to vector<2x128xf32>
    %161 = arith.addf %160, %159 : vector<2x128xf32>
    %162 = arith.divf %160, %161 : vector<2x128xf32>
    %163 = vector.extract_strided_slice %157 {offsets = [0, 64], sizes = [2, 32], strides = [1, 1]} : vector<2x128xf32> to vector<2x32xf32>
    %164 = math.tanh %163 : vector<2x32xf32>
    %165 = vector.extract_strided_slice %162 {offsets = [0, 32], sizes = [2, 32], strides = [1, 1]} : vector<2x128xf32> to vector<2x32xf32>
    %166 = arith.mulf %165, %150 : vector<2x32xf32>
    %167 = vector.extract_strided_slice %162 {offsets = [0, 0], sizes = [2, 32], strides = [1, 1]} : vector<2x128xf32> to vector<2x32xf32>
    %168 = arith.mulf %167, %164 : vector<2x32xf32>
    %169 = arith.addf %166, %168 : vector<2x32xf32>
    %170 = vector.extract_strided_slice %162 {offsets = [0, 96], sizes = [2, 32], strides = [1, 1]} : vector<2x128xf32> to vector<2x32xf32>
    %171 = math.tanh %169 : vector<2x32xf32>
    %172 = arith.mulf %170, %171 : vector<2x32xf32>
    %173 = vector.extract_strided_slice %20 {offsets = [0, 0], sizes = [2, 128], strides = [1, 1]} : vector<16x128xf32> to vector<2x128xf32>
    %174 = arith.truncf %172 : vector<2x32xf32> to vector<2x32xbf16>
    %cst_36 = arith.constant dense<0.000000e+00> : vector<2x128xf32>
    %175 = tpu.matmul %174, %3, %cst_36 {dimension_numbers = #tpu.dot_dimension_numbers<[1], [0], [0], [1], [0, 0, 1, 1], [], []>} : vector<2x32xbf16>, vector<32x128xbf16>, vector<2x128xf32> -> vector<2x128xf32>
    %176 = arith.addf %173, %175 : vector<2x128xf32>
    %177 = arith.negf %176 : vector<2x128xf32>
    %178 = math.exp %177 : vector<2x128xf32>
    %cst_37 = arith.constant 1.000000e+00 : f32
    %179 = vector.broadcast %cst_37 : f32 to vector<2x128xf32>
    %180 = arith.addf %179, %178 : vector<2x128xf32>
    %181 = arith.divf %179, %180 : vector<2x128xf32>
    %182 = vector.extract_strided_slice %176 {offsets = [0, 64], sizes = [2, 32], strides = [1, 1]} : vector<2x128xf32> to vector<2x32xf32>
    %183 = math.tanh %182 : vector<2x32xf32>
    %184 = vector.extract_strided_slice %181 {offsets = [0, 32], sizes = [2, 32], strides = [1, 1]} : vector<2x128xf32> to vector<2x32xf32>
    %185 = arith.mulf %184, %169 : vector<2x32xf32>
    %186 = vector.extract_strided_slice %181 {offsets = [0, 0], sizes = [2, 32], strides = [1, 1]} : vector<2x128xf32> to vector<2x32xf32>
    %187 = arith.mulf %186, %183 : vector<2x32xf32>
    %188 = arith.addf %185, %187 : vector<2x32xf32>
    %189 = vector.extract_strided_slice %181 {offsets = [0, 96], sizes = [2, 32], strides = [1, 1]} : vector<2x128xf32> to vector<2x32xf32>
    %190 = math.tanh %188 : vector<2x32xf32>
    %191 = arith.mulf %189, %190 : vector<2x32xf32>
    %192 = vector.extract_strided_slice %20 {offsets = [2, 0], sizes = [2, 128], strides = [1, 1]} : vector<16x128xf32> to vector<2x128xf32>
    %193 = arith.truncf %191 : vector<2x32xf32> to vector<2x32xbf16>
    %cst_38 = arith.constant dense<0.000000e+00> : vector<2x128xf32>
    %194 = tpu.matmul %193, %3, %cst_38 {dimension_numbers = #tpu.dot_dimension_numbers<[1], [0], [0], [1], [0, 0, 1, 1], [], []>} : vector<2x32xbf16>, vector<32x128xbf16>, vector<2x128xf32> -> vector<2x128xf32>
    %195 = arith.addf %192, %194 : vector<2x128xf32>
    %196 = arith.negf %195 : vector<2x128xf32>
    %197 = math.exp %196 : vector<2x128xf32>
    %cst_39 = arith.constant 1.000000e+00 : f32
    %198 = vector.broadcast %cst_39 : f32 to vector<2x128xf32>
    %199 = arith.addf %198, %197 : vector<2x128xf32>
    %200 = arith.divf %198, %199 : vector<2x128xf32>
    %201 = vector.extract_strided_slice %195 {offsets = [0, 64], sizes = [2, 32], strides = [1, 1]} : vector<2x128xf32> to vector<2x32xf32>
    %202 = math.tanh %201 : vector<2x32xf32>
    %203 = vector.extract_strided_slice %200 {offsets = [0, 32], sizes = [2, 32], strides = [1, 1]} : vector<2x128xf32> to vector<2x32xf32>
    %204 = arith.mulf %203, %188 : vector<2x32xf32>
    %205 = vector.extract_strided_slice %200 {offsets = [0, 0], sizes = [2, 32], strides = [1, 1]} : vector<2x128xf32> to vector<2x32xf32>
    %206 = arith.mulf %205, %202 : vector<2x32xf32>
    %207 = arith.addf %204, %206 : vector<2x32xf32>
    %208 = vector.extract_strided_slice %200 {offsets = [0, 96], sizes = [2, 32], strides = [1, 1]} : vector<2x128xf32> to vector<2x32xf32>
    %209 = math.tanh %207 : vector<2x32xf32>
    %210 = arith.mulf %208, %209 : vector<2x32xf32>
    %211 = vector.extract_strided_slice %20 {offsets = [4, 0], sizes = [2, 128], strides = [1, 1]} : vector<16x128xf32> to vector<2x128xf32>
    %212 = arith.truncf %210 : vector<2x32xf32> to vector<2x32xbf16>
    %cst_40 = arith.constant dense<0.000000e+00> : vector<2x128xf32>
    %213 = tpu.matmul %212, %3, %cst_40 {dimension_numbers = #tpu.dot_dimension_numbers<[1], [0], [0], [1], [0, 0, 1, 1], [], []>} : vector<2x32xbf16>, vector<32x128xbf16>, vector<2x128xf32> -> vector<2x128xf32>
    %214 = arith.addf %211, %213 : vector<2x128xf32>
    %215 = arith.negf %214 : vector<2x128xf32>
    %216 = math.exp %215 : vector<2x128xf32>
    %cst_41 = arith.constant 1.000000e+00 : f32
    %217 = vector.broadcast %cst_41 : f32 to vector<2x128xf32>
    %218 = arith.addf %217, %216 : vector<2x128xf32>
    %219 = arith.divf %217, %218 : vector<2x128xf32>
    %220 = vector.extract_strided_slice %214 {offsets = [0, 64], sizes = [2, 32], strides = [1, 1]} : vector<2x128xf32> to vector<2x32xf32>
    %221 = math.tanh %220 : vector<2x32xf32>
    %222 = vector.extract_strided_slice %219 {offsets = [0, 32], sizes = [2, 32], strides = [1, 1]} : vector<2x128xf32> to vector<2x32xf32>
    %223 = arith.mulf %222, %207 : vector<2x32xf32>
    %224 = vector.extract_strided_slice %219 {offsets = [0, 0], sizes = [2, 32], strides = [1, 1]} : vector<2x128xf32> to vector<2x32xf32>
    %225 = arith.mulf %224, %221 : vector<2x32xf32>
    %226 = arith.addf %223, %225 : vector<2x32xf32>
    %227 = vector.extract_strided_slice %219 {offsets = [0, 96], sizes = [2, 32], strides = [1, 1]} : vector<2x128xf32> to vector<2x32xf32>
    %228 = math.tanh %226 : vector<2x32xf32>
    %229 = arith.mulf %227, %228 : vector<2x32xf32>
    %230 = vector.extract_strided_slice %20 {offsets = [6, 0], sizes = [2, 128], strides = [1, 1]} : vector<16x128xf32> to vector<2x128xf32>
    %231 = arith.truncf %229 : vector<2x32xf32> to vector<2x32xbf16>
    %cst_42 = arith.constant dense<0.000000e+00> : vector<2x128xf32>
    %232 = tpu.matmul %231, %3, %cst_42 {dimension_numbers = #tpu.dot_dimension_numbers<[1], [0], [0], [1], [0, 0, 1, 1], [], []>} : vector<2x32xbf16>, vector<32x128xbf16>, vector<2x128xf32> -> vector<2x128xf32>
    %233 = arith.addf %230, %232 : vector<2x128xf32>
    %234 = arith.negf %233 : vector<2x128xf32>
    %235 = math.exp %234 : vector<2x128xf32>
    %cst_43 = arith.constant 1.000000e+00 : f32
    %236 = vector.broadcast %cst_43 : f32 to vector<2x128xf32>
    %237 = arith.addf %236, %235 : vector<2x128xf32>
    %238 = arith.divf %236, %237 : vector<2x128xf32>
    %239 = vector.extract_strided_slice %233 {offsets = [0, 64], sizes = [2, 32], strides = [1, 1]} : vector<2x128xf32> to vector<2x32xf32>
    %240 = math.tanh %239 : vector<2x32xf32>
    %241 = vector.extract_strided_slice %238 {offsets = [0, 32], sizes = [2, 32], strides = [1, 1]} : vector<2x128xf32> to vector<2x32xf32>
    %242 = arith.mulf %241, %226 : vector<2x32xf32>
    %243 = vector.extract_strided_slice %238 {offsets = [0, 0], sizes = [2, 32], strides = [1, 1]} : vector<2x128xf32> to vector<2x32xf32>
    %244 = arith.mulf %243, %240 : vector<2x32xf32>
    %245 = arith.addf %242, %244 : vector<2x32xf32>
    %246 = vector.extract_strided_slice %238 {offsets = [0, 96], sizes = [2, 32], strides = [1, 1]} : vector<2x128xf32> to vector<2x32xf32>
    %247 = math.tanh %245 : vector<2x32xf32>
    %248 = arith.mulf %246, %247 : vector<2x32xf32>
    %249 = vector.extract_strided_slice %20 {offsets = [8, 0], sizes = [2, 128], strides = [1, 1]} : vector<16x128xf32> to vector<2x128xf32>
    %250 = arith.truncf %248 : vector<2x32xf32> to vector<2x32xbf16>
    %cst_44 = arith.constant dense<0.000000e+00> : vector<2x128xf32>
    %251 = tpu.matmul %250, %3, %cst_44 {dimension_numbers = #tpu.dot_dimension_numbers<[1], [0], [0], [1], [0, 0, 1, 1], [], []>} : vector<2x32xbf16>, vector<32x128xbf16>, vector<2x128xf32> -> vector<2x128xf32>
    %252 = arith.addf %249, %251 : vector<2x128xf32>
    %253 = arith.negf %252 : vector<2x128xf32>
    %254 = math.exp %253 : vector<2x128xf32>
    %cst_45 = arith.constant 1.000000e+00 : f32
    %255 = vector.broadcast %cst_45 : f32 to vector<2x128xf32>
    %256 = arith.addf %255, %254 : vector<2x128xf32>
    %257 = arith.divf %255, %256 : vector<2x128xf32>
    %258 = vector.extract_strided_slice %252 {offsets = [0, 64], sizes = [2, 32], strides = [1, 1]} : vector<2x128xf32> to vector<2x32xf32>
    %259 = math.tanh %258 : vector<2x32xf32>
    %260 = vector.extract_strided_slice %257 {offsets = [0, 32], sizes = [2, 32], strides = [1, 1]} : vector<2x128xf32> to vector<2x32xf32>
    %261 = arith.mulf %260, %245 : vector<2x32xf32>
    %262 = vector.extract_strided_slice %257 {offsets = [0, 0], sizes = [2, 32], strides = [1, 1]} : vector<2x128xf32> to vector<2x32xf32>
    %263 = arith.mulf %262, %259 : vector<2x32xf32>
    %264 = arith.addf %261, %263 : vector<2x32xf32>
    %265 = vector.extract_strided_slice %257 {offsets = [0, 96], sizes = [2, 32], strides = [1, 1]} : vector<2x128xf32> to vector<2x32xf32>
    %266 = math.tanh %264 : vector<2x32xf32>
    %267 = arith.mulf %265, %266 : vector<2x32xf32>
    %268 = vector.extract_strided_slice %20 {offsets = [10, 0], sizes = [2, 128], strides = [1, 1]} : vector<16x128xf32> to vector<2x128xf32>
    %269 = arith.truncf %267 : vector<2x32xf32> to vector<2x32xbf16>
    %cst_46 = arith.constant dense<0.000000e+00> : vector<2x128xf32>
    %270 = tpu.matmul %269, %3, %cst_46 {dimension_numbers = #tpu.dot_dimension_numbers<[1], [0], [0], [1], [0, 0, 1, 1], [], []>} : vector<2x32xbf16>, vector<32x128xbf16>, vector<2x128xf32> -> vector<2x128xf32>
    %271 = arith.addf %268, %270 : vector<2x128xf32>
    %272 = arith.negf %271 : vector<2x128xf32>
    %273 = math.exp %272 : vector<2x128xf32>
    %cst_47 = arith.constant 1.000000e+00 : f32
    %274 = vector.broadcast %cst_47 : f32 to vector<2x128xf32>
    %275 = arith.addf %274, %273 : vector<2x128xf32>
    %276 = arith.divf %274, %275 : vector<2x128xf32>
    %277 = vector.extract_strided_slice %271 {offsets = [0, 64], sizes = [2, 32], strides = [1, 1]} : vector<2x128xf32> to vector<2x32xf32>
    %278 = math.tanh %277 : vector<2x32xf32>
    %279 = vector.extract_strided_slice %276 {offsets = [0, 32], sizes = [2, 32], strides = [1, 1]} : vector<2x128xf32> to vector<2x32xf32>
    %280 = arith.mulf %279, %264 : vector<2x32xf32>
    %281 = vector.extract_strided_slice %276 {offsets = [0, 0], sizes = [2, 32], strides = [1, 1]} : vector<2x128xf32> to vector<2x32xf32>
    %282 = arith.mulf %281, %278 : vector<2x32xf32>
    %283 = arith.addf %280, %282 : vector<2x32xf32>
    %284 = vector.extract_strided_slice %276 {offsets = [0, 96], sizes = [2, 32], strides = [1, 1]} : vector<2x128xf32> to vector<2x32xf32>
    %285 = math.tanh %283 : vector<2x32xf32>
    %286 = arith.mulf %284, %285 : vector<2x32xf32>
    %287 = vector.extract_strided_slice %20 {offsets = [12, 0], sizes = [2, 128], strides = [1, 1]} : vector<16x128xf32> to vector<2x128xf32>
    %288 = arith.truncf %286 : vector<2x32xf32> to vector<2x32xbf16>
    %cst_48 = arith.constant dense<0.000000e+00> : vector<2x128xf32>
    %289 = tpu.matmul %288, %3, %cst_48 {dimension_numbers = #tpu.dot_dimension_numbers<[1], [0], [0], [1], [0, 0, 1, 1], [], []>} : vector<2x32xbf16>, vector<32x128xbf16>, vector<2x128xf32> -> vector<2x128xf32>
    %290 = arith.addf %287, %289 : vector<2x128xf32>
    %291 = arith.negf %290 : vector<2x128xf32>
    %292 = math.exp %291 : vector<2x128xf32>
    %cst_49 = arith.constant 1.000000e+00 : f32
    %293 = vector.broadcast %cst_49 : f32 to vector<2x128xf32>
    %294 = arith.addf %293, %292 : vector<2x128xf32>
    %295 = arith.divf %293, %294 : vector<2x128xf32>
    %296 = vector.extract_strided_slice %290 {offsets = [0, 64], sizes = [2, 32], strides = [1, 1]} : vector<2x128xf32> to vector<2x32xf32>
    %297 = math.tanh %296 : vector<2x32xf32>
    %298 = vector.extract_strided_slice %295 {offsets = [0, 32], sizes = [2, 32], strides = [1, 1]} : vector<2x128xf32> to vector<2x32xf32>
    %299 = arith.mulf %298, %283 : vector<2x32xf32>
    %300 = vector.extract_strided_slice %295 {offsets = [0, 0], sizes = [2, 32], strides = [1, 1]} : vector<2x128xf32> to vector<2x32xf32>
    %301 = arith.mulf %300, %297 : vector<2x32xf32>
    %302 = arith.addf %299, %301 : vector<2x32xf32>
    %303 = vector.extract_strided_slice %295 {offsets = [0, 96], sizes = [2, 32], strides = [1, 1]} : vector<2x128xf32> to vector<2x32xf32>
    %304 = math.tanh %302 : vector<2x32xf32>
    %305 = arith.mulf %303, %304 : vector<2x32xf32>
    %306 = vector.extract_strided_slice %20 {offsets = [14, 0], sizes = [2, 128], strides = [1, 1]} : vector<16x128xf32> to vector<2x128xf32>
    %307 = arith.truncf %305 : vector<2x32xf32> to vector<2x32xbf16>
    %cst_50 = arith.constant dense<0.000000e+00> : vector<2x128xf32>
    %308 = tpu.matmul %307, %3, %cst_50 {dimension_numbers = #tpu.dot_dimension_numbers<[1], [0], [0], [1], [0, 0, 1, 1], [], []>} : vector<2x32xbf16>, vector<32x128xbf16>, vector<2x128xf32> -> vector<2x128xf32>
    %309 = arith.addf %306, %308 : vector<2x128xf32>
    %310 = arith.negf %309 : vector<2x128xf32>
    %311 = math.exp %310 : vector<2x128xf32>
    %cst_51 = arith.constant 1.000000e+00 : f32
    %312 = vector.broadcast %cst_51 : f32 to vector<2x128xf32>
    %313 = arith.addf %312, %311 : vector<2x128xf32>
    %314 = arith.divf %312, %313 : vector<2x128xf32>
    %315 = vector.extract_strided_slice %309 {offsets = [0, 64], sizes = [2, 32], strides = [1, 1]} : vector<2x128xf32> to vector<2x32xf32>
    %316 = math.tanh %315 : vector<2x32xf32>
    %317 = vector.extract_strided_slice %314 {offsets = [0, 32], sizes = [2, 32], strides = [1, 1]} : vector<2x128xf32> to vector<2x32xf32>
    %318 = arith.mulf %317, %302 : vector<2x32xf32>
    %319 = vector.extract_strided_slice %314 {offsets = [0, 0], sizes = [2, 32], strides = [1, 1]} : vector<2x128xf32> to vector<2x32xf32>
    %320 = arith.mulf %319, %316 : vector<2x32xf32>
    %321 = arith.addf %318, %320 : vector<2x32xf32>
    %322 = vector.extract_strided_slice %314 {offsets = [0, 96], sizes = [2, 32], strides = [1, 1]} : vector<2x128xf32> to vector<2x32xf32>
    %323 = math.tanh %321 : vector<2x32xf32>
    %324 = arith.mulf %322, %323 : vector<2x32xf32>
    %325 = vector.extract_strided_slice %39 {offsets = [0, 0], sizes = [1, 32], strides = [1, 1]} : vector<2x32xf32> to vector<1x32xf32>
    %326 = vector.extract_strided_slice %58 {offsets = [0, 0], sizes = [1, 32], strides = [1, 1]} : vector<2x32xf32> to vector<1x32xf32>
    %327 = vector.extract_strided_slice %77 {offsets = [0, 0], sizes = [1, 32], strides = [1, 1]} : vector<2x32xf32> to vector<1x32xf32>
    %328 = vector.extract_strided_slice %96 {offsets = [0, 0], sizes = [1, 32], strides = [1, 1]} : vector<2x32xf32> to vector<1x32xf32>
    %329 = vector.extract_strided_slice %115 {offsets = [0, 0], sizes = [1, 32], strides = [1, 1]} : vector<2x32xf32> to vector<1x32xf32>
    %330 = vector.extract_strided_slice %134 {offsets = [0, 0], sizes = [1, 32], strides = [1, 1]} : vector<2x32xf32> to vector<1x32xf32>
    %331 = vector.extract_strided_slice %153 {offsets = [0, 0], sizes = [1, 32], strides = [1, 1]} : vector<2x32xf32> to vector<1x32xf32>
    %332 = vector.extract_strided_slice %172 {offsets = [0, 0], sizes = [1, 32], strides = [1, 1]} : vector<2x32xf32> to vector<1x32xf32>
    %333 = vector.extract_strided_slice %39 {offsets = [1, 0], sizes = [1, 32], strides = [1, 1]} : vector<2x32xf32> to vector<1x32xf32>
    %334 = vector.extract_strided_slice %58 {offsets = [1, 0], sizes = [1, 32], strides = [1, 1]} : vector<2x32xf32> to vector<1x32xf32>
    %335 = vector.extract_strided_slice %77 {offsets = [1, 0], sizes = [1, 32], strides = [1, 1]} : vector<2x32xf32> to vector<1x32xf32>
    %336 = vector.extract_strided_slice %96 {offsets = [1, 0], sizes = [1, 32], strides = [1, 1]} : vector<2x32xf32> to vector<1x32xf32>
    %337 = vector.extract_strided_slice %115 {offsets = [1, 0], sizes = [1, 32], strides = [1, 1]} : vector<2x32xf32> to vector<1x32xf32>
    %338 = vector.extract_strided_slice %134 {offsets = [1, 0], sizes = [1, 32], strides = [1, 1]} : vector<2x32xf32> to vector<1x32xf32>
    %339 = vector.extract_strided_slice %153 {offsets = [1, 0], sizes = [1, 32], strides = [1, 1]} : vector<2x32xf32> to vector<1x32xf32>
    %340 = vector.extract_strided_slice %172 {offsets = [1, 0], sizes = [1, 32], strides = [1, 1]} : vector<2x32xf32> to vector<1x32xf32>
    %341 = tpu.concatenate %325, %326, %327, %328, %329, %330, %331, %332, %333, %334, %335, %336, %337, %338, %339, %340 in 0 : vector<1x32xf32>, vector<1x32xf32>, vector<1x32xf32>, vector<1x32xf32>, vector<1x32xf32>, vector<1x32xf32>, vector<1x32xf32>, vector<1x32xf32>, vector<1x32xf32>, vector<1x32xf32>, vector<1x32xf32>, vector<1x32xf32>, vector<1x32xf32>, vector<1x32xf32>, vector<1x32xf32>, vector<1x32xf32> -> vector<16x32xf32>
    %342 = vector.extract_strided_slice %191 {offsets = [0, 0], sizes = [1, 32], strides = [1, 1]} : vector<2x32xf32> to vector<1x32xf32>
    %343 = vector.extract_strided_slice %210 {offsets = [0, 0], sizes = [1, 32], strides = [1, 1]} : vector<2x32xf32> to vector<1x32xf32>
    %344 = vector.extract_strided_slice %229 {offsets = [0, 0], sizes = [1, 32], strides = [1, 1]} : vector<2x32xf32> to vector<1x32xf32>
    %345 = vector.extract_strided_slice %248 {offsets = [0, 0], sizes = [1, 32], strides = [1, 1]} : vector<2x32xf32> to vector<1x32xf32>
    %346 = vector.extract_strided_slice %267 {offsets = [0, 0], sizes = [1, 32], strides = [1, 1]} : vector<2x32xf32> to vector<1x32xf32>
    %347 = vector.extract_strided_slice %286 {offsets = [0, 0], sizes = [1, 32], strides = [1, 1]} : vector<2x32xf32> to vector<1x32xf32>
    %348 = vector.extract_strided_slice %305 {offsets = [0, 0], sizes = [1, 32], strides = [1, 1]} : vector<2x32xf32> to vector<1x32xf32>
    %349 = vector.extract_strided_slice %324 {offsets = [0, 0], sizes = [1, 32], strides = [1, 1]} : vector<2x32xf32> to vector<1x32xf32>
    %350 = vector.extract_strided_slice %191 {offsets = [1, 0], sizes = [1, 32], strides = [1, 1]} : vector<2x32xf32> to vector<1x32xf32>
    %351 = vector.extract_strided_slice %210 {offsets = [1, 0], sizes = [1, 32], strides = [1, 1]} : vector<2x32xf32> to vector<1x32xf32>
    %352 = vector.extract_strided_slice %229 {offsets = [1, 0], sizes = [1, 32], strides = [1, 1]} : vector<2x32xf32> to vector<1x32xf32>
    %353 = vector.extract_strided_slice %248 {offsets = [1, 0], sizes = [1, 32], strides = [1, 1]} : vector<2x32xf32> to vector<1x32xf32>
    %354 = vector.extract_strided_slice %267 {offsets = [1, 0], sizes = [1, 32], strides = [1, 1]} : vector<2x32xf32> to vector<1x32xf32>
    %355 = vector.extract_strided_slice %286 {offsets = [1, 0], sizes = [1, 32], strides = [1, 1]} : vector<2x32xf32> to vector<1x32xf32>
    %356 = vector.extract_strided_slice %305 {offsets = [1, 0], sizes = [1, 32], strides = [1, 1]} : vector<2x32xf32> to vector<1x32xf32>
    %357 = vector.extract_strided_slice %324 {offsets = [1, 0], sizes = [1, 32], strides = [1, 1]} : vector<2x32xf32> to vector<1x32xf32>
    %358 = tpu.concatenate %342, %343, %344, %345, %346, %347, %348, %349, %350, %351, %352, %353, %354, %355, %356, %357 in 0 : vector<1x32xf32>, vector<1x32xf32>, vector<1x32xf32>, vector<1x32xf32>, vector<1x32xf32>, vector<1x32xf32>, vector<1x32xf32>, vector<1x32xf32>, vector<1x32xf32>, vector<1x32xf32>, vector<1x32xf32>, vector<1x32xf32>, vector<1x32xf32>, vector<1x32xf32>, vector<1x32xf32>, vector<1x32xf32> -> vector<16x32xf32>
    %359 = arith.truncf %341 : vector<16x32xf32> to vector<16x32xbf16>
    %c0_52 = arith.constant 0 : index
    %c0_53 = arith.constant 0 : index
    %360 = vector.load %arg3[%c0_52, %c0_53] : memref<32x32xbf16, #tpu.memory_space<vmem>>, vector<32x32xbf16>
    %cst_54 = arith.constant dense<0.000000e+00> : vector<16x32xf32>
    %361 = tpu.matmul %359, %360, %cst_54 {dimension_numbers = #tpu.dot_dimension_numbers<[1], [0], [0], [1], [0, 0, 1, 1], [], []>} : vector<16x32xbf16>, vector<32x32xbf16>, vector<16x32xf32> -> vector<16x32xf32>
    %362 = vector.broadcast %6 : vector<1x32xf32> to vector<16x32xf32>
    %363 = arith.addf %361, %362 : vector<16x32xf32>
    %364 = arith.truncf %363 : vector<16x32xf32> to vector<16x32xbf16>
    %365 = arith.truncf %358 : vector<16x32xf32> to vector<16x32xbf16>
    %366 = tpu.iota {dimensions = array<i32: 0>} : vector<8x4xi32>
    %367 = tpu.iota {dimensions = array<i32: 1>} : vector<8x4xi32>
    %c2_i32 = arith.constant 2 : i32
    %368 = vector.broadcast %c2_i32 : i32 to vector<8x4xi32>
    %369 = arith.muli %367, %368 : vector<8x4xi32>
    %370 = arith.cmpi sge, %366, %369 : vector<8x4xi32>
    %c1_i32 = arith.constant 1 : i32
    %371 = vector.broadcast %c1_i32 : i32 to vector<8x4xi32>
    %372 = arith.addi %367, %371 : vector<8x4xi32>
    %c2_i32_55 = arith.constant 2 : i32
    %373 = vector.broadcast %c2_i32_55 : i32 to vector<8x4xi32>
    %374 = arith.muli %372, %373 : vector<8x4xi32>
    %375 = arith.cmpi slt, %366, %374 : vector<8x4xi32>
    %376 = arith.andi %370, %375 : vector<8x4xi1>
    %377 = arith.extui %376 : vector<8x4xi1> to vector<8x4xi32>
    %378 = arith.sitofp %377 : vector<8x4xi32> to vector<8x4xf32>
    %379 = vector.extract_strided_slice %364 {offsets = [0, 0], sizes = [8, 32], strides = [1, 1]} : vector<16x32xbf16> to vector<8x32xbf16>
    %380 = vector.extract_strided_slice %365 {offsets = [0, 0], sizes = [8, 32], strides = [1, 1]} : vector<16x32xbf16> to vector<8x32xbf16>
    %cst_56 = arith.constant dense<0.000000e+00> : vector<8x8xf32>
    %381 = tpu.matmul %380, %379, %cst_56 {dimension_numbers = #tpu.dot_dimension_numbers<[1], [1], [0], [0], [0, 0, 1, 0], [], []>} : vector<8x32xbf16>, vector<8x32xbf16>, vector<8x8xf32> -> vector<8x8xf32>
    %cst_57 = arith.constant dense<0xFF800000> : vector<8xf32>
    %382 = vector.multi_reduction <maximumf>, %381, %cst_57 [1] : vector<8x8xf32> to vector<8xf32>
    %383 = vector.shape_cast %382 : vector<8xf32> to vector<8x1xf32>
    %384 = vector.broadcast %383 : vector<8x1xf32> to vector<8x8xf32>
    %385 = arith.subf %381, %384 : vector<8x8xf32>
    %386 = math.exp %385 : vector<8x8xf32>
    %cst_58 = arith.constant dense<0.000000e+00> : vector<8xf32>
    %387 = vector.multi_reduction <add>, %386, %cst_58 [1] : vector<8x8xf32> to vector<8xf32>
    %388 = vector.shape_cast %387 : vector<8xf32> to vector<8x1xf32>
    %389 = tpu.reciprocal %388 {approx = true} : vector<8x1xf32> -> vector<8x1xf32>
    %390 = vector.broadcast %389 : vector<8x1xf32> to vector<8x8xf32>
    %391 = arith.mulf %386, %390 : vector<8x8xf32>
    %392 = arith.truncf %391 : vector<8x8xf32> to vector<8x8xbf16>
    %cst_59 = arith.constant dense<0.000000e+00> : vector<8x32xf32>
    %393 = tpu.matmul %392, %379, %cst_59 {dimension_numbers = #tpu.dot_dimension_numbers<[1], [0], [0], [1], [0, 0, 1, 1], [], []>} : vector<8x8xbf16>, vector<8x32xbf16>, vector<8x32xf32> -> vector<8x32xf32>
    %394 = vector.extract_strided_slice %358 {offsets = [0, 0], sizes = [8, 32], strides = [1, 1]} : vector<16x32xf32> to vector<8x32xf32>
    %395 = arith.mulf %394, %10 : vector<8x32xf32>
    %396 = arith.mulf %393, %11 : vector<8x32xf32>
    %397 = arith.addf %395, %396 : vector<8x32xf32>
    %cst_60 = arith.constant dense<0.000000e+00> : vector<8xf32>
    %398 = vector.multi_reduction <add>, %397, %cst_60 [1] : vector<8x32xf32> to vector<8xf32>
    %399 = vector.shape_cast %398 : vector<8xf32> to vector<8x1xf32>
    %400 = vector.broadcast %399 : vector<8x1xf32> to vector<8x4xf32>
    %401 = arith.mulf %400, %378 : vector<8x4xf32>
    %cst_61 = arith.constant dense<0.000000e+00> : vector<4xf32>
    %402 = vector.multi_reduction <add>, %401, %cst_61 [0] : vector<8x4xf32> to vector<4xf32>
    %403 = vector.shape_cast %402 : vector<4xf32> to vector<1x4xf32>
    %404 = vector.extract_strided_slice %364 {offsets = [8, 0], sizes = [8, 32], strides = [1, 1]} : vector<16x32xbf16> to vector<8x32xbf16>
    %405 = vector.extract_strided_slice %365 {offsets = [8, 0], sizes = [8, 32], strides = [1, 1]} : vector<16x32xbf16> to vector<8x32xbf16>
    %cst_62 = arith.constant dense<0.000000e+00> : vector<8x8xf32>
    %406 = tpu.matmul %405, %404, %cst_62 {dimension_numbers = #tpu.dot_dimension_numbers<[1], [1], [0], [0], [0, 0, 1, 0], [], []>} : vector<8x32xbf16>, vector<8x32xbf16>, vector<8x8xf32> -> vector<8x8xf32>
    %cst_63 = arith.constant dense<0xFF800000> : vector<8xf32>
    %407 = vector.multi_reduction <maximumf>, %406, %cst_63 [1] : vector<8x8xf32> to vector<8xf32>
    %408 = vector.shape_cast %407 : vector<8xf32> to vector<8x1xf32>
    %409 = vector.broadcast %408 : vector<8x1xf32> to vector<8x8xf32>
    %410 = arith.subf %406, %409 : vector<8x8xf32>
    %411 = math.exp %410 : vector<8x8xf32>
    %cst_64 = arith.constant dense<0.000000e+00> : vector<8xf32>
    %412 = vector.multi_reduction <add>, %411, %cst_64 [1] : vector<8x8xf32> to vector<8xf32>
    %413 = vector.shape_cast %412 : vector<8xf32> to vector<8x1xf32>
    %414 = tpu.reciprocal %413 {approx = true} : vector<8x1xf32> -> vector<8x1xf32>
    %415 = vector.broadcast %414 : vector<8x1xf32> to vector<8x8xf32>
    %416 = arith.mulf %411, %415 : vector<8x8xf32>
    %417 = arith.truncf %416 : vector<8x8xf32> to vector<8x8xbf16>
    %cst_65 = arith.constant dense<0.000000e+00> : vector<8x32xf32>
    %418 = tpu.matmul %417, %404, %cst_65 {dimension_numbers = #tpu.dot_dimension_numbers<[1], [0], [0], [1], [0, 0, 1, 1], [], []>} : vector<8x8xbf16>, vector<8x32xbf16>, vector<8x32xf32> -> vector<8x32xf32>
    %419 = vector.extract_strided_slice %358 {offsets = [8, 0], sizes = [8, 32], strides = [1, 1]} : vector<16x32xf32> to vector<8x32xf32>
    %420 = arith.mulf %419, %10 : vector<8x32xf32>
    %421 = arith.mulf %418, %11 : vector<8x32xf32>
    %422 = arith.addf %420, %421 : vector<8x32xf32>
    %cst_66 = arith.constant dense<0.000000e+00> : vector<8xf32>
    %423 = vector.multi_reduction <add>, %422, %cst_66 [1] : vector<8x32xf32> to vector<8xf32>
    %424 = vector.shape_cast %423 : vector<8xf32> to vector<8x1xf32>
    %425 = vector.broadcast %424 : vector<8x1xf32> to vector<8x4xf32>
    %426 = arith.mulf %425, %378 : vector<8x4xf32>
    %cst_67 = arith.constant dense<0.000000e+00> : vector<4xf32>
    %427 = vector.multi_reduction <add>, %426, %cst_67 [0] : vector<8x4xf32> to vector<4xf32>
    %428 = vector.shape_cast %427 : vector<4xf32> to vector<1x4xf32>
    %429 = tpu.concatenate %403, %428 in 1 : vector<1x4xf32>, vector<1x4xf32> -> vector<1x8xf32>
    %430 = vector.broadcast %7 : vector<1x1xf32> to vector<1x8xf32>
    %431 = arith.addf %429, %430 : vector<1x8xf32>
    %c0_68 = arith.constant 0 : index
    %c0_69 = arith.constant 0 : index
    %432 = vector.load %arg7[%c0_68, %c0_69] : memref<1x8xf32, #tpu.memory_space<vmem>>, vector<1x8xf32>
    tpu.vector_store %arg7[%c0_68, %c0_69], %431 {strides = array<i32>} : memref<1x8xf32, #tpu.memory_space<vmem>>, vector<1x8xf32>,
    return
  }
  func.func @transform_0(%arg0: i32) -> (i32, i32) {
    %c0_i32 = arith.constant 0 : i32
    %c0_i32_0 = arith.constant 0 : i32
    %c0_i32_1 = arith.constant 0 : i32
    return %c0_i32, %c0_i32_0 : i32, i32
  }
  func.func @transform_1(%arg0: i32) -> (i32, i32) {
    %c0_i32 = arith.constant 0 : i32
    %c0_i32_0 = arith.constant 0 : i32
    %c0_i32_1 = arith.constant 0 : i32
    return %c0_i32, %c0_i32_0 : i32, i32
  }
  func.func @transform_2(%arg0: i32) -> (i32, i32) {
    %c0_i32 = arith.constant 0 : i32
    %c0_i32_0 = arith.constant 0 : i32
    %c0_i32_1 = arith.constant 0 : i32
    return %c0_i32, %c0_i32_0 : i32, i32
  }
  func.func @transform_3(%arg0: i32) -> (i32, i32) {
    %c0_i32 = arith.constant 0 : i32
    %c0_i32_0 = arith.constant 0 : i32
    %c0_i32_1 = arith.constant 0 : i32
    return %c0_i32, %c0_i32_0 : i32, i32
  }
  func.func @transform_4(%arg0: i32) -> (i32, i32) {
    %c0_i32 = arith.constant 0 : i32
    %c0_i32_0 = arith.constant 0 : i32
    %c0_i32_1 = arith.constant 0 : i32
    return %c0_i32, %c0_i32_0 : i32, i32
  }
  func.func @transform_5(%arg0: i32) -> (i32, i32) {
    %c0_i32 = arith.constant 0 : i32
    %c0_i32_0 = arith.constant 0 : i32
    %c0_i32_1 = arith.constant 0 : i32
    return %c0_i32, %c0_i32_0 : i32, i32
  }
  func.func @transform_6(%arg0: i32) -> (i32, i32) {
    %c0_i32 = arith.constant 0 : i32
    %c0_i32_0 = arith.constant 0 : i32
    %c0_i32_1 = arith.constant 0 : i32
    return %c0_i32, %c0_i32_0 : i32, i32
  }
}

</mosaic_0001>

<llo_original>
// kernel: tpu_custom_call.1
$region0: #{tpu_custom_call.1}
  #allocation0 [shape = 'u32[]', space=smem, size = 0x4, offset = 0x4, fixed_abs, tag = 'smem constant byte address 0x4 - core index']
  #allocation1 [shape = 'u32[72,128]{1,0:T(1,128)}', space=vmem, size = 0x9000, scoped, tag = 'internal scratch']
  %s0 = inlined_call_operand.vmem [shape: bf16[32,8], index: 0, kind: input, shape index: {}]
  %s1 = inlined_call_operand.hbm [shape: bf16[80,128], index: 1, kind: input, shape index: {}]
  %s2 = inlined_call_operand.vmem [shape: bf16[32,32], index: 2, kind: input, shape index: {}]
  %s3 = inlined_call_operand.vmem [shape: f32[4,128], index: 3, kind: input, shape index: {}]
  %s4 = inlined_call_operand.hbm [shape: f32[4,32], index: 4, kind: input, shape index: {}]
  %s5 = inlined_call_operand.hbm [shape: f32[16,32], index: 5, kind: input, shape index: {}]
  %s6 = inlined_call_operand.hbm [shape: f32[1,8], index: 6, kind: output, shape index: {}]
  %s7 = sld [smem:[#allocation0]]
  $region46: #{tpu_custom_call.1} parent=0
    _
  %s9 = ssub.s32 1, %s7
  %s10 = scalar_select 0, %s9, %s7
  $region1: #{tpu_custom_call.1} parent=0
    #allocation2 [shape = 'u8[20480]{0}', space=vmem, size = 0x5000, scoped, tag = 'input window, operand 1, single buffered']
    #allocation3 [shape = 's32[1]{0}', space=sflag, size = 0x4, scoped, tag = 'scoped memory for tpu_custom_call.1']
    #allocation4 [shape = 's32[1]{0}', space=sflag, size = 0x4, scoped, tag = 'scoped memory for tpu_custom_call.1']
    #allocation5 [shape = 'u8[2048]{0}', space=vmem, size = 0x800, scoped, tag = 'input window, operand 4, single buffered']
    #allocation6 [shape = 's32[1]{0}', space=sflag, size = 0x4, scoped, tag = 'scoped memory for tpu_custom_call.1']
    #allocation7 [shape = 'u8[8192]{0}', space=vmem, size = 0x2000, scoped, tag = 'input window, operand 5, single buffered']
    #allocation8 [shape = 'u8[512]{0}', space=vmem, size = 0x400, scoped, tag = 'output window, operand 0, single buffered']
    %11 = vsyncpa [#allocation3], 0
    %12 = vsyncpa [#allocation6], 0
    %13 = vsyncpa [#allocation4], 0
    // Predicated region
    $region2: #{tpu_custom_call.1} parent=1 // pred_check
      _
    $region3: #{tpu_custom_call.1} parent=1 // pred_check_branch
      %15 = sbr.rel (0) target = $region5
    $region4: #{tpu_custom_call.1} parent=1 // pred_region
      _
    $region5: #{tpu_custom_call.1} parent=1 // pred_fallthru
      _
    // Predicated region
    $region6: #{tpu_custom_call.1} parent=1 // pred_check
      _
    $region7: #{tpu_custom_call.1} parent=1 // pred_check_branch
      %17 = sbr.rel (0) target = $region9
    $region8: #{tpu_custom_call.1} parent=1 // pred_region
      %19 = vsyncadd [#allocation3], 0
      %s20 = sshll.u32 %s1, 4
      %s21 = int_to_ptr.hbm [resolvable:$true] %s20
      %s22 = sshll.u32 [#allocation2], 4
      %s23 = int_to_ptr.vmem [resolvable:$true] %s22
      %28 = dma.hbm_to_vmem [thread:$0]  %s21, 640, %s23, [#allocation3], 64, 64, 4
    $region9: #{tpu_custom_call.1} parent=1 // pred_fallthru
      _
    // Predicated region
    $region10: #{tpu_custom_call.1} parent=1 // pred_check
      _
    $region11: #{tpu_custom_call.1} parent=1 // pred_check_branch
      %30 = sbr.rel (0) target = $region13
    $region12: #{tpu_custom_call.1} parent=1 // pred_region
      _
    $region13: #{tpu_custom_call.1} parent=1 // pred_fallthru
      _
    // Predicated region
    $region14: #{tpu_custom_call.1} parent=1 // pred_check
      _
    $region15: #{tpu_custom_call.1} parent=1 // pred_check_branch
      %32 = sbr.rel (0) target = $region17
    $region16: #{tpu_custom_call.1} parent=1 // pred_region
      _
    $region17: #{tpu_custom_call.1} parent=1 // pred_fallthru
      _
    // Predicated region
    $region18: #{tpu_custom_call.1} parent=1 // pred_check
      _
    $region19: #{tpu_custom_call.1} parent=1 // pred_check_branch
      %34 = sbr.rel (0) target = $region21
    $region20: #{tpu_custom_call.1} parent=1 // pred_region
      %36 = vsyncadd [#allocation6], 0
      %s38 = sshll.u32 %s4, 4
      %s39 = int_to_ptr.hbm [resolvable:$true] %s38
      %s40 = sshll.u32 [#allocation5], 4
      %s41 = int_to_ptr.vmem [resolvable:$true] %s40
      %43 = dma.hbm_to_vmem [thread:$0]  %s39, 64, %s41, [#allocation6]
    $region21: #{tpu_custom_call.1} parent=1 // pred_fallthru
      _
    // Predicated region
    $region22: #{tpu_custom_call.1} parent=1 // pred_check
      _
    $region23: #{tpu_custom_call.1} parent=1 // pred_check_branch
      %45 = sbr.rel (0) target = $region25
    $region24: #{tpu_custom_call.1} parent=1 // pred_region
      %47 = vsyncadd [#allocation6], 0
      %s48 = sshll.u32 %s5, 4
      %s49 = int_to_ptr.hbm [resolvable:$true] %s48
      %s50 = sshll.u32 [#allocation7], 4
      %s51 = int_to_ptr.vmem [resolvable:$true] %s50
      %56 = dma.hbm_to_vmem [thread:$0]  %s49, 256, %s51, [#allocation6], 128, 128, 8
    $region25: #{tpu_custom_call.1} parent=1 // pred_fallthru
      _
    // Predicated region
    $region26: #{tpu_custom_call.1} parent=1 // pred_check
      _
    $region27: #{tpu_custom_call.1} parent=1 // pred_check_branch
      %58 = sbr.rel (0) target = $region29
    $region28: #{tpu_custom_call.1} parent=1 // pred_region
      %60 = dma.done [#allocation3], 640
    $region29: #{tpu_custom_call.1} parent=1 // pred_fallthru
      _
    // Predicated region
    $region30: #{tpu_custom_call.1} parent=1 // pred_check
      _
    $region31: #{tpu_custom_call.1} parent=1 // pred_check_branch
      %62 = sbr.rel (0) target = $region33
    $region32: #{tpu_custom_call.1} parent=1 // pred_region
      %64 = dma.done [#allocation6], 64
    $region33: #{tpu_custom_call.1} parent=1 // pred_fallthru
      _
    // Predicated region
    $region34: #{tpu_custom_call.1} parent=1 // pred_check
      _
    $region35: #{tpu_custom_call.1} parent=1 // pred_check_branch
      %66 = sbr.rel (0) target = $region37
    $region36: #{tpu_custom_call.1} parent=1 // pred_region
      %68 = dma.done [#allocation6], 256
    $region37: #{tpu_custom_call.1} parent=1 // pred_fallthru
      _
    %v70 = vld [vmem:[#allocation2] sm:$0xf]
    %v71 = vld [vmem:[#allocation2 + $0x4] sm:$0xf]
    %v72 = vld [vmem:[#allocation2 + $0x8] sm:$0xf]
    %v73 = vld [vmem:[#allocation2 + $0xc] sm:$0xf]
    %v74 = vld [vmem:[#allocation2 + $0x10] sm:$0xf]
    %v75 = vld [vmem:[#allocation2 + $0x14] sm:$0xf]
    %v76 = vld [vmem:[#allocation2 + $0x18] sm:$0xf]
    %v77 = vld [vmem:[#allocation2 + $0x1c] sm:$0xf]
    %v78 = vld [vmem:[#allocation2 + $0x20] sm:$0xf]
    %v79 = vld [vmem:[#allocation2 + $0x24] sm:$0xf]
    %v80 = vld [vmem:[%s3] sm:$0x1]
    %v81 = vld [vmem:[%s3 + $0x1] sm:$0x1]
    %v82 = vld [vmem:[%s3 + $0x2] sm:$0x1]
    %v83 = vld [vmem:[%s3 + $0x3] sm:$0x1]
    %v84 = vld [vmem:[#allocation5] sm:$0x3]
    %v85 = vld [vmem:[#allocation5 + $0x2] sm:$0x3]
    %v86 = vld [vmem:[#allocation7] sm:$0xff]
    %v87 = vld [vmem:[#allocation7 + $0x8] sm:$0xff]
    %v88 = vld [vmem:[%s0] sm:$0xf]
    %v89 = vld [vmem:[%s0 + $0x4] sm:$0xf]
    %v90 = vld [vmem:[%s0 + $0x8] sm:$0xf]
    %v91 = vld [vmem:[%s0 + $0xc] sm:$0xf]
    %v92 = vperm.slane %v80, 0
    %v95 = vunpack.c.l.b16 %v88
    %v96 = vunpack.c.l.b16 %v89
    %v97 = vpack.c.b16 %v96, %v95
    %vm98 = vcmask 64512
    %v100 = vsel %vm98, %v97, 0
    %vm102 = vcmask 1043456
    %v104 = vsel %vm102, %v70, 0
    %106 = vmatpush.bf16.msra.mxu0 0
    %107 = vmatpush.bf16.msra.mxu0 0
    %108 = vmatpush.bf16.msra.mxu0 0
    %109 = vmatpush.bf16.msra.mxu0 0
    %110 = vmatpush.bf16.msra.mxu0 0
    %111 = vmatpush.bf16.msra.mxu0 0
    %112 = vmatpush.bf16.msra.mxu0 0
    %113 = vmatpush.bf16.msra.mxu0 %v104
    %114 = vmatmul.bf16.gmra.mxu0 %v100
    %v115 = vpop.f32.mrf.mxu0
    %v116 = vadd.f32 %v92, %v115
    %v117 = vpop.f32.mrf.mxu0
    %v118 = vadd.f32 %v92, %v117
    %119 = vdwg.mxu0
    %v120 = vperm.slane %v81, 0
    %v123 = vunpack.c.l.b16 %v90
    %v124 = vunpack.c.l.b16 %v91
    %v125 = vpack.c.b16 %v124, %v123
    %v127 = vsel %vm98, %v125, 0
    %v130 = vsel %vm102, %v71, 0
    %132 = vmatpush.bf16.msra.mxu0 0
    %133 = vmatpush.bf16.msra.mxu0 0
    %134 = vmatpush.bf16.msra.mxu0 0
    %135 = vmatpush.bf16.msra.mxu0 0
    %136 = vmatpush.bf16.msra.mxu0 0
    %137 = vmatpush.bf16.msra.mxu0 0
    %138 = vmatpush.bf16.msra.mxu0 0
    %139 = vmatpush.bf16.msra.mxu0 %v130
    %140 = vmatmul.bf16.gmra.mxu0 %v127
    %v141 = vpop.f32.mrf.mxu0
    %v142 = vadd.f32 %v120, %v141
    %v143 = vpop.f32.mrf.mxu0
    %v144 = vadd.f32 %v120, %v143
    %145 = vdwg.mxu0
    %v146 = vpack.c.bf16 %v84, %v84
    %v151 = vunpack.c.l.b16 %v72
    %v152 = vunpack.c.l.b16 %v73
    %v153 = vunpack.c.l.b16 %v74
    %v154 = vunpack.c.l.b16 %v75
    %v155 = vpack.c.b16 %v152, %v151
    %v156 = vpack.c.b16 %v154, %v153
    %vm159 = vcmask 261120
    %v161 = vsel %vm159, %v146, 0
    %163 = vmatpush.bf16.msra.mxu0 0
    %164 = vmatpush.bf16.msra.mxu0 0
    %165 = vmatpush.bf16.msra.mxu0 0
    %166 = vmatpush.bf16.msra.mxu0 0
    %167 = vmatpush.bf16.msra.mxu0 0
    %168 = vmatpush.bf16.msra.mxu0 0
    %169 = vmatpush.bf16.msra.mxu0 %v156
    %170 = vmatpush.bf16.msra.mxu0 %v155
    %171 = vmatmul.bf16.gmra.mxu0 %v161
    %v172 = vpop.f32.mrf.mxu0
    %v173 = vadd.f32 0.0, %v172
    %v174 = vpop.f32.mrf.mxu0
    %175 = vdwg.mxu0
    %v176 = vadd.f32 %v116, %v173
    %v177 = vxor.u32 %v176, 2147483648
    %v178 = vmul.f32 %v177, 1.442695
    %v179 = vpow.pop %v178
    %v180 = vadd.f32 %v179, 1.0
    %v181 = vrcp.pop %v180
    %v182 = vmul.f32 %v180, %v181
    %v183 = vsub.f32 1.0, %v182
    %v184 = vmul.f32 %v181, %v183
    %v185 = vadd.f32 %v181, %v184
    %vm186 = vweird.f32 %v180
    %vm187 = vweird.f32 %v181
    %vm188 = vmor %vm186, %vm187
    %v189 = vsel %vm188, %v181, %v185
    %v190 = vand.u32 2147483647, %v180
    %vm191 = vcmp.eq.f32.partialorder %v190, 8.507059e+37
    %v192 = vand.u32 %v180, 2147483648
    %v193 = vor.u32 1.1754944e-38, %v192
    %v194 = vsel %vm191, %v193, %v189
    %v195 = vmul.f32 1.0, %v194
    %v196 = vtanh.pop %v176
    %198 = vrot.lane.b32.xlu0 %v85, 32
    %v199 = vpop.permute.xlu0 %198
    %v201 = vmul.f32 %v195, %v199
    %203 = vrot.lane.b32.xlu0 %v196, 64
    %v204 = vpop.permute.xlu0 %203
    %v206 = vmul.f32 %v195, %v204
    %208 = vrot.lane.b32.xlu0 %v206, 32
    %v209 = vpop.permute.xlu0 %208
    %v211 = vadd.f32 %v201, %v209
    %v212 = vtanh.pop %v211
    %214 = vrot.lane.b32.xlu0 %v212, 64
    %v215 = vpop.permute.xlu0 %214
    %v217 = vmul.f32 %v195, %v215
    %v218 = vpack.c.bf16 %v217, %v217
    %220 = vrot.lane.b32.xlu0 %v218, 32
    %v221 = vpop.permute.xlu0 %220
    %v223 = vsel %vm159, %v221, 0
    %225 = vmatpush.bf16.msra.mxu0 0
    %226 = vmatpush.bf16.msra.mxu0 0
    %227 = vmatpush.bf16.msra.mxu0 0
    %228 = vmatpush.bf16.msra.mxu0 0
    %229 = vmatpush.bf16.msra.mxu0 0
    %230 = vmatpush.bf16.msra.mxu0 0
    %231 = vmatpush.bf16.msra.mxu0 %v156
    %232 = vmatpush.bf16.msra.mxu0 %v155
    %233 = vmatmul.bf16.gmra.mxu0 %v223
    %v234 = vpop.f32.mrf.mxu0
    %v235 = vadd.f32 0.0, %v234
    %v236 = vpop.f32.mrf.mxu0
    %237 = vdwg.mxu0
    %v239 = vrot.slane %v235, 6
    %v241 = vadd.f32 %v116, %v239
    %v242 = vxor.u32 %v241, 2147483648
    %v243 = vmul.f32 %v242, 1.442695
    %v244 = vpow.pop %v243
    %v245 = vadd.f32 %v244, 1.0
    %v246 = vrcp.pop %v245
    %v247 = vmul.f32 %v245, %v246
    %v248 = vsub.f32 1.0, %v247
    %v249 = vmul.f32 %v246, %v248
    %v250 = vadd.f32 %v246, %v249
    %vm251 = vweird.f32 %v245
    %vm252 = vweird.f32 %v246
    %vm253 = vmor %vm251, %vm252
    %v254 = vsel %vm253, %v246, %v250
    %v255 = vand.u32 2147483647, %v245
    %vm256 = vcmp.eq.f32.partialorder %v255, 8.507059e+37
    %v257 = vand.u32 %v245, 2147483648
    %v258 = vor.u32 1.1754944e-38, %v257
    %v259 = vsel %vm256, %v258, %v254
    %v260 = vmul.f32 1.0, %v259
    %v261 = vtanh.pop %v241
    %v263 = vrot.slane %v211, 6
    %v265 = vmul.f32 %v260, %v263
    %267 = vrot.lane.b32.xlu0 %v261, 64
    %v268 = vpop.permute.xlu0 %267
    %v270 = vmul.f32 %v260, %v268
    %272 = vrot.lane.b32.xlu0 %v270, 32
    %v273 = vpop.permute.xlu0 %272
    %v275 = vadd.f32 %v265, %v273
    %v276 = vtanh.pop %v275
    %278 = vrot.lane.b32.xlu0 %v276, 64
    %v279 = vpop.permute.xlu0 %278
    %v281 = vmul.f32 %v260, %v279
    %v282 = vpack.c.bf16 %v281, %v281
    %v284 = vrot.slane %v282, 1
    %285 = vrot.lane.b32.xlu0 %v284, 32
    %v286 = vpop.permute.xlu0 %285
    %v288 = vsel %vm159, %v286, 0
    %290 = vmatpush.bf16.msra.mxu0 0
    %291 = vmatpush.bf16.msra.mxu0 0
    %292 = vmatpush.bf16.msra.mxu0 0
    %293 = vmatpush.bf16.msra.mxu0 0
    %294 = vmatpush.bf16.msra.mxu0 0
    %295 = vmatpush.bf16.msra.mxu0 0
    %296 = vmatpush.bf16.msra.mxu0 %v156
    %297 = vmatpush.bf16.msra.mxu0 %v155
    %298 = vmatmul.bf16.gmra.mxu0 %v288
    %v299 = vpop.f32.mrf.mxu0
    %v300 = vadd.f32 0.0, %v299
    %v301 = vpop.f32.mrf.mxu0
    %302 = vdwg.mxu0
    %v304 = vrot.slane %v300, 4
    %v306 = vadd.f32 %v116, %v304
    %v307 = vxor.u32 %v306, 2147483648
    %v308 = vmul.f32 %v307, 1.442695
    %v309 = vpow.pop %v308
    %v310 = vadd.f32 %v309, 1.0
    %v311 = vrcp.pop %v310
    %v312 = vmul.f32 %v310, %v311
    %v313 = vsub.f32 1.0, %v312
    %v314 = vmul.f32 %v311, %v313
    %v315 = vadd.f32 %v311, %v314
    %vm316 = vweird.f32 %v310
    %vm317 = vweird.f32 %v311
    %vm318 = vmor %vm316, %vm317
    %v319 = vsel %vm318, %v311, %v315
    %v320 = vand.u32 2147483647, %v310
    %vm321 = vcmp.eq.f32.partialorder %v320, 8.507059e+37
    %v322 = vand.u32 %v310, 2147483648
    %v323 = vor.u32 1.1754944e-38, %v322
    %v324 = vsel %vm321, %v323, %v319
    %v325 = vmul.f32 1.0, %v324
    %v326 = vtanh.pop %v306
    %v328 = vrot.slane %v275, 6
    %v330 = vmul.f32 %v325, %v328
    %332 = vrot.lane.b32.xlu0 %v326, 64
    %v333 = vpop.permute.xlu0 %332
    %v335 = vmul.f32 %v325, %v333
    %337 = vrot.lane.b32.xlu0 %v335, 32
    %v338 = vpop.permute.xlu0 %337
    %v340 = vadd.f32 %v330, %v338
    %v341 = vtanh.pop %v340
    %343 = vrot.lane.b32.xlu0 %v341, 64
    %v344 = vpop.permute.xlu0 %343
    %v346 = vmul.f32 %v325, %v344
    %v347 = vpack.c.bf16 %v346, %v346
    %v349 = vrot.slane %v347, 2
    %350 = vrot.lane.b32.xlu0 %v349, 32
    %v351 = vpop.permute.xlu0 %350
    %v353 = vsel %vm159, %v351, 0
    %355 = vmatpush.bf16.msra.mxu0 0
    %356 = vmatpush.bf16.msra.mxu0 0
    %357 = vmatpush.bf16.msra.mxu0 0
    %358 = vmatpush.bf16.msra.mxu0 0
    %359 = vmatpush.bf16.msra.mxu0 0
    %360 = vmatpush.bf16.msra.mxu0 0
    %361 = vmatpush.bf16.msra.mxu0 %v156
    %362 = vmatpush.bf16.msra.mxu0 %v155
    %363 = vmatmul.bf16.gmra.mxu0 %v353
    %v364 = vpop.f32.mrf.mxu0
    %v365 = vadd.f32 0.0, %v364
    %v366 = vpop.f32.mrf.mxu0
    %367 = vdwg.mxu0
    %v369 = vrot.slane %v365, 2
    %v371 = vadd.f32 %v116, %v369
    %v372 = vxor.u32 %v371, 2147483648
    %v373 = vmul.f32 %v372, 1.442695
    %v374 = vpow.pop %v373
    %v375 = vadd.f32 %v374, 1.0
    %v376 = vrcp.pop %v375
    %v377 = vmul.f32 %v375, %v376
    %v378 = vsub.f32 1.0, %v377
    %v379 = vmul.f32 %v376, %v378
    %v380 = vadd.f32 %v376, %v379
    %vm381 = vweird.f32 %v375
    %vm382 = vweird.f32 %v376
    %vm383 = vmor %vm381, %vm382
    %v384 = vsel %vm383, %v376, %v380
    %v385 = vand.u32 2147483647, %v375
    %vm386 = vcmp.eq.f32.partialorder %v385, 8.507059e+37
    %v387 = vand.u32 %v375, 2147483648
    %v388 = vor.u32 1.1754944e-38, %v387
    %v389 = vsel %vm386, %v388, %v384
    %v390 = vmul.f32 1.0, %v389
    %v391 = vtanh.pop %v371
    %v393 = vrot.slane %v340, 6
    %v395 = vmul.f32 %v390, %v393
    %397 = vrot.lane.b32.xlu0 %v391, 64
    %v398 = vpop.permute.xlu0 %397
    %v400 = vmul.f32 %v390, %v398
    %402 = vrot.lane.b32.xlu0 %v400, 32
    %v403 = vpop.permute.xlu0 %402
    %v405 = vadd.f32 %v395, %v403
    %v406 = vtanh.pop %v405
    %408 = vrot.lane.b32.xlu0 %v406, 64
    %v409 = vpop.permute.xlu0 %408
    %v411 = vmul.f32 %v390, %v409
    %v412 = vpack.c.bf16 %v411, %v411
    %v414 = vrot.slane %v412, 3
    %415 = vrot.lane.b32.xlu0 %v414, 32
    %v416 = vpop.permute.xlu0 %415
    %v418 = vsel %vm159, %v416, 0
    %420 = vmatpush.bf16.msra.mxu0 0
    %421 = vmatpush.bf16.msra.mxu0 0
    %422 = vmatpush.bf16.msra.mxu0 0
    %423 = vmatpush.bf16.msra.mxu0 0
    %424 = vmatpush.bf16.msra.mxu0 0
    %425 = vmatpush.bf16.msra.mxu0 0
    %426 = vmatpush.bf16.msra.mxu0 %v156
    %427 = vmatpush.bf16.msra.mxu0 %v155
    %428 = vmatmul.bf16.gmra.mxu0 %v418
    %v429 = vpop.f32.mrf.mxu0
    %v430 = vadd.f32 0.0, %v429
    %v431 = vpop.f32.mrf.mxu0
    %432 = vdwg.mxu0
    %v433 = vadd.f32 %v118, %v430
    %v434 = vxor.u32 %v433, 2147483648
    %v435 = vmul.f32 %v434, 1.442695
    %v436 = vpow.pop %v435
    %v437 = vadd.f32 %v436, 1.0
    %v438 = vrcp.pop %v437
    %v439 = vmul.f32 %v437, %v438
    %v440 = vsub.f32 1.0, %v439
    %v441 = vmul.f32 %v438, %v440
    %v442 = vadd.f32 %v438, %v441
    %vm443 = vweird.f32 %v437
    %vm444 = vweird.f32 %v438
    %vm445 = vmor %vm443, %vm444
    %v446 = vsel %vm445, %v438, %v442
    %v447 = vand.u32 2147483647, %v437
    %vm448 = vcmp.eq.f32.partialorder %v447, 8.507059e+37
    %v449 = vand.u32 %v437, 2147483648
    %v450 = vor.u32 1.1754944e-38, %v449
    %v451 = vsel %vm448, %v450, %v446
    %v452 = vmul.f32 1.0, %v451
    %v453 = vtanh.pop %v433
    %v455 = vrot.slane %v405, 6
    %v457 = vmul.f32 %v452, %v455
    %459 = vrot.lane.b32.xlu0 %v453, 64
    %v460 = vpop.permute.xlu0 %459
    %v462 = vmul.f32 %v452, %v460
    %464 = vrot.lane.b32.xlu0 %v462, 32
    %v465 = vpop.permute.xlu0 %464
    %v467 = vadd.f32 %v457, %v465
    %v468 = vtanh.pop %v467
    %470 = vrot.lane.b32.xlu0 %v468, 64
    %v471 = vpop.permute.xlu0 %470
    %v473 = vmul.f32 %v452, %v471
    %v474 = vpack.c.bf16 %v473, %v473
    %476 = vrot.lane.b32.xlu0 %v474, 32
    %v477 = vpop.permute.xlu0 %476
    %v479 = vsel %vm159, %v477, 0
    %481 = vmatpush.bf16.msra.mxu0 0
    %482 = vmatpush.bf16.msra.mxu0 0
    %483 = vmatpush.bf16.msra.mxu0 0
    %484 = vmatpush.bf16.msra.mxu0 0
    %485 = vmatpush.bf16.msra.mxu0 0
    %486 = vmatpush.bf16.msra.mxu0 0
    %487 = vmatpush.bf16.msra.mxu0 %v156
    %488 = vmatpush.bf16.msra.mxu0 %v155
    %489 = vmatmul.bf16.gmra.mxu0 %v479
    %v490 = vpop.f32.mrf.mxu0
    %v491 = vadd.f32 0.0, %v490
    %v492 = vpop.f32.mrf.mxu0
    %493 = vdwg.mxu0
    %v495 = vrot.slane %v491, 6
    %v497 = vadd.f32 %v118, %v495
    %v498 = vxor.u32 %v497, 2147483648
    %v499 = vmul.f32 %v498, 1.442695
    %v500 = vpow.pop %v499
    %v501 = vadd.f32 %v500, 1.0
    %v502 = vrcp.pop %v501
    %v503 = vmul.f32 %v501, %v502
    %v504 = vsub.f32 1.0, %v503
    %v505 = vmul.f32 %v502, %v504
    %v506 = vadd.f32 %v502, %v505
    %vm507 = vweird.f32 %v501
    %vm508 = vweird.f32 %v502
    %vm509 = vmor %vm507, %vm508
    %v510 = vsel %vm509, %v502, %v506
    %v511 = vand.u32 2147483647, %v501
    %vm512 = vcmp.eq.f32.partialorder %v511, 8.507059e+37
    %v513 = vand.u32 %v501, 2147483648
    %v514 = vor.u32 1.1754944e-38, %v513
    %v515 = vsel %vm512, %v514, %v510
    %v516 = vmul.f32 1.0, %v515
    %v517 = vtanh.pop %v497
    %v519 = vrot.slane %v467, 6
    %v521 = vmul.f32 %v516, %v519
    %523 = vrot.lane.b32.xlu0 %v517, 64
    %v524 = vpop.permute.xlu0 %523
    %v526 = vmul.f32 %v516, %v524
    %528 = vrot.lane.b32.xlu0 %v526, 32
    %v529 = vpop.permute.xlu0 %528
    %v531 = vadd.f32 %v521, %v529
    %v532 = vtanh.pop %v531
    %534 = vrot.lane.b32.xlu0 %v532, 64
    %v535 = vpop.permute.xlu0 %534
    %v537 = vmul.f32 %v516, %v535
    %v538 = vpack.c.bf16 %v537, %v537
    %v540 = vrot.slane %v538, 1
    %541 = vrot.lane.b32.xlu0 %v540, 32
    %v542 = vpop.permute.xlu0 %541
    %v544 = vsel %vm159, %v542, 0
    %546 = vmatpush.bf16.msra.mxu0 0
    %547 = vmatpush.bf16.msra.mxu0 0
    %548 = vmatpush.bf16.msra.mxu0 0
    %549 = vmatpush.bf16.msra.mxu0 0
    %550 = vmatpush.bf16.msra.mxu0 0
    %551 = vmatpush.bf16.msra.mxu0 0
    %552 = vmatpush.bf16.msra.mxu0 %v156
    %553 = vmatpush.bf16.msra.mxu0 %v155
    %554 = vmatmul.bf16.gmra.mxu0 %v544
    %v555 = vpop.f32.mrf.mxu0
    %v556 = vadd.f32 0.0, %v555
    %v557 = vpop.f32.mrf.mxu0
    %558 = vdwg.mxu0
    %v560 = vrot.slane %v556, 4
    %v562 = vadd.f32 %v118, %v560
    %v563 = vxor.u32 %v562, 2147483648
    %v564 = vmul.f32 %v563, 1.442695
    %v565 = vpow.pop %v564
    %v566 = vadd.f32 %v565, 1.0
    %v567 = vrcp.pop %v566
    %v568 = vmul.f32 %v566, %v567
    %v569 = vsub.f32 1.0, %v568
    %v570 = vmul.f32 %v567, %v569
    %v571 = vadd.f32 %v567, %v570
    %vm572 = vweird.f32 %v566
    %vm573 = vweird.f32 %v567
    %vm574 = vmor %vm572, %vm573
    %v575 = vsel %vm574, %v567, %v571
    %v576 = vand.u32 2147483647, %v566
    %vm577 = vcmp.eq.f32.partialorder %v576, 8.507059e+37
    %v578 = vand.u32 %v566, 2147483648
    %v579 = vor.u32 1.1754944e-38, %v578
    %v580 = vsel %vm577, %v579, %v575
    %v581 = vmul.f32 1.0, %v580
    %v582 = vtanh.pop %v562
    %v584 = vrot.slane %v531, 6
    %v586 = vmul.f32 %v581, %v584
    %588 = vrot.lane.b32.xlu0 %v582, 64
    %v589 = vpop.permute.xlu0 %588
    %v591 = vmul.f32 %v581, %v589
    %593 = vrot.lane.b32.xlu0 %v591, 32
    %v594 = vpop.permute.xlu0 %593
    %v596 = vadd.f32 %v586, %v594
    %v597 = vtanh.pop %v596
    %599 = vrot.lane.b32.xlu0 %v597, 64
    %v600 = vpop.permute.xlu0 %599
    %v602 = vmul.f32 %v581, %v600
    %v603 = vpack.c.bf16 %v602, %v602
    %v605 = vrot.slane %v603, 2
    %606 = vrot.lane.b32.xlu0 %v605, 32
    %v607 = vpop.permute.xlu0 %606
    %v609 = vsel %vm159, %v607, 0
    %611 = vmatpush.bf16.msra.mxu0 0
    %612 = vmatpush.bf16.msra.mxu0 0
    %613 = vmatpush.bf16.msra.mxu0 0
    %614 = vmatpush.bf16.msra.mxu0 0
    %615 = vmatpush.bf16.msra.mxu0 0
    %616 = vmatpush.bf16.msra.mxu0 0
    %617 = vmatpush.bf16.msra.mxu0 %v156
    %618 = vmatpush.bf16.msra.mxu0 %v155
    %619 = vmatmul.bf16.gmra.mxu0 %v609
    %v620 = vpop.f32.mrf.mxu0
    %v621 = vadd.f32 0.0, %v620
    %v622 = vpop.f32.mrf.mxu0
    %623 = vdwg.mxu0
    %v625 = vrot.slane %v621, 2
    %v627 = vadd.f32 %v118, %v625
    %v628 = vxor.u32 %v627, 2147483648
    %v629 = vmul.f32 %v628, 1.442695
    %v630 = vpow.pop %v629
    %v631 = vadd.f32 %v630, 1.0
    %v632 = vrcp.pop %v631
    %v633 = vmul.f32 %v631, %v632
    %v634 = vsub.f32 1.0, %v633
    %v635 = vmul.f32 %v632, %v634
    %v636 = vadd.f32 %v632, %v635
    %vm637 = vweird.f32 %v631
    %vm638 = vweird.f32 %v632
    %vm639 = vmor %vm637, %vm638
    %v640 = vsel %vm639, %v632, %v636
    %v641 = vand.u32 2147483647, %v631
    %vm642 = vcmp.eq.f32.partialorder %v641, 8.507059e+37
    %v643 = vand.u32 %v631, 2147483648
    %v644 = vor.u32 1.1754944e-38, %v643
    %v645 = vsel %vm642, %v644, %v640
    %v646 = vmul.f32 1.0, %v645
    %v647 = vtanh.pop %v627
    %v649 = vrot.slane %v596, 6
    %v651 = vmul.f32 %v646, %v649
    %653 = vrot.lane.b32.xlu0 %v647, 64
    %v654 = vpop.permute.xlu0 %653
    %v656 = vmul.f32 %v646, %v654
    %658 = vrot.lane.b32.xlu0 %v656, 32
    %v659 = vpop.permute.xlu0 %658
    %v661 = vadd.f32 %v651, %v659
    %v662 = vtanh.pop %v661
    %664 = vrot.lane.b32.xlu0 %v662, 64
    %v665 = vpop.permute.xlu0 %664
    %v667 = vmul.f32 %v646, %v665
    %v668 = vpack.c.bf16 %v667, %v667
    %v670 = vrot.slane %v668, 3
    %671 = vrot.lane.b32.xlu0 %v670, 32
    %v672 = vpop.permute.xlu0 %671
    %v677 = vunpack.c.l.b16 %v76
    %v678 = vunpack.c.l.b16 %v77
    %v679 = vunpack.c.l.b16 %v78
    %v680 = vunpack.c.l.b16 %v79
    %v681 = vpack.c.b16 %v678, %v677
    %v682 = vpack.c.b16 %v680, %v679
    %v686 = vsel %vm159, %v672, 0
    %688 = vmatpush.bf16.msra.mxu0 0
    %689 = vmatpush.bf16.msra.mxu0 0
    %690 = vmatpush.bf16.msra.mxu0 0
    %691 = vmatpush.bf16.msra.mxu0 0
    %692 = vmatpush.bf16.msra.mxu0 0
    %693 = vmatpush.bf16.msra.mxu0 0
    %694 = vmatpush.bf16.msra.mxu0 %v682
    %695 = vmatpush.bf16.msra.mxu0 %v681
    %696 = vmatmul.bf16.gmra.mxu0 %v686
    %v697 = vpop.f32.mrf.mxu0
    %v698 = vadd.f32 0.0, %v697
    %v699 = vpop.f32.mrf.mxu0
    %700 = vdwg.mxu0
    %v701 = vadd.f32 %v142, %v698
    %v702 = vxor.u32 %v701, 2147483648
    %v703 = vmul.f32 %v702, 1.442695
    %v704 = vpow.pop %v703
    %v705 = vadd.f32 %v704, 1.0
    %v706 = vrcp.pop %v705
    %v707 = vmul.f32 %v705, %v706
    %v708 = vsub.f32 1.0, %v707
    %v709 = vmul.f32 %v706, %v708
    %v710 = vadd.f32 %v706, %v709
    %vm711 = vweird.f32 %v705
    %vm712 = vweird.f32 %v706
    %vm713 = vmor %vm711, %vm712
    %v714 = vsel %vm713, %v706, %v710
    %v715 = vand.u32 2147483647, %v705
    %vm716 = vcmp.eq.f32.partialorder %v715, 8.507059e+37
    %v717 = vand.u32 %v705, 2147483648
    %v718 = vor.u32 1.1754944e-38, %v717
    %v719 = vsel %vm716, %v718, %v714
    %v720 = vmul.f32 1.0, %v719
    %v721 = vtanh.pop %v701
    %v723 = vrot.slane %v661, 6
    %v725 = vmul.f32 %v720, %v723
    %727 = vrot.lane.b32.xlu0 %v721, 64
    %v728 = vpop.permute.xlu0 %727
    %v730 = vmul.f32 %v720, %v728
    %732 = vrot.lane.b32.xlu0 %v730, 32
    %v733 = vpop.permute.xlu0 %732
    %v735 = vadd.f32 %v725, %v733
    %v736 = vtanh.pop %v735
    %738 = vrot.lane.b32.xlu0 %v736, 64
    %v739 = vpop.permute.xlu0 %738
    %v741 = vmul.f32 %v720, %v739
    %v742 = vpack.c.bf16 %v741, %v741
    %744 = vrot.lane.b32.xlu0 %v742, 32
    %v745 = vpop.permute.xlu0 %744
    %v747 = vsel %vm159, %v745, 0
    %749 = vmatpush.bf16.msra.mxu0 0
    %750 = vmatpush.bf16.msra.mxu0 0
    %751 = vmatpush.bf16.msra.mxu0 0
    %752 = vmatpush.bf16.msra.mxu0 0
    %753 = vmatpush.bf16.msra.mxu0 0
    %754 = vmatpush.bf16.msra.mxu0 0
    %755 = vmatpush.bf16.msra.mxu0 %v682
    %756 = vmatpush.bf16.msra.mxu0 %v681
    %757 = vmatmul.bf16.gmra.mxu0 %v747
    %v758 = vpop.f32.mrf.mxu0
    %v759 = vadd.f32 0.0, %v758
    %v760 = vpop.f32.mrf.mxu0
    %761 = vdwg.mxu0
    %v763 = vrot.slane %v759, 6
    %v765 = vadd.f32 %v142, %v763
    %v766 = vxor.u32 %v765, 2147483648
    %v767 = vmul.f32 %v766, 1.442695
    %v768 = vpow.pop %v767
    %v769 = vadd.f32 %v768, 1.0
    %v770 = vrcp.pop %v769
    %v771 = vmul.f32 %v769, %v770
    %v772 = vsub.f32 1.0, %v771
    %v773 = vmul.f32 %v770, %v772
    %v774 = vadd.f32 %v770, %v773
    %vm775 = vweird.f32 %v769
    %vm776 = vweird.f32 %v770
    %vm777 = vmor %vm775, %vm776
    %v778 = vsel %vm777, %v770, %v774
    %v779 = vand.u32 2147483647, %v769
    %vm780 = vcmp.eq.f32.partialorder %v779, 8.507059e+37
    %v781 = vand.u32 %v769, 2147483648
    %v782 = vor.u32 1.1754944e-38, %v781
    %v783 = vsel %vm780, %v782, %v778
    %v784 = vmul.f32 1.0, %v783
    %v785 = vtanh.pop %v765
    %v787 = vrot.slane %v735, 6
    %v789 = vmul.f32 %v784, %v787
    %791 = vrot.lane.b32.xlu0 %v785, 64
    %v792 = vpop.permute.xlu0 %791
    %v794 = vmul.f32 %v784, %v792
    %796 = vrot.lane.b32.xlu0 %v794, 32
    %v797 = vpop.permute.xlu0 %796
    %v799 = vadd.f32 %v789, %v797
    %v800 = vtanh.pop %v799
    %802 = vrot.lane.b32.xlu0 %v800, 64
    %v803 = vpop.permute.xlu0 %802
    %v805 = vmul.f32 %v784, %v803
    %v806 = vpack.c.bf16 %v805, %v805
    %v808 = vrot.slane %v806, 1
    %809 = vrot.lane.b32.xlu0 %v808, 32
    %v810 = vpop.permute.xlu0 %809
    %v812 = vsel %vm159, %v810, 0
    %814 = vmatpush.bf16.msra.mxu0 0
    %815 = vmatpush.bf16.msra.mxu0 0
    %816 = vmatpush.bf16.msra.mxu0 0
    %817 = vmatpush.bf16.msra.mxu0 0
    %818 = vmatpush.bf16.msra.mxu0 0
    %819 = vmatpush.bf16.msra.mxu0 0
    %820 = vmatpush.bf16.msra.mxu0 %v682
    %821 = vmatpush.bf16.msra.mxu0 %v681
    %822 = vmatmul.bf16.gmra.mxu0 %v812
    %v823 = vpop.f32.mrf.mxu0
    %v824 = vadd.f32 0.0, %v823
    %v825 = vpop.f32.mrf.mxu0
    %826 = vdwg.mxu0
    %v828 = vrot.slane %v824, 4
    %v830 = vadd.f32 %v142, %v828
    %v831 = vxor.u32 %v830, 2147483648
    %v832 = vmul.f32 %v831, 1.442695
    %v833 = vpow.pop %v832
    %v834 = vadd.f32 %v833, 1.0
    %v835 = vrcp.pop %v834
    %v836 = vmul.f32 %v834, %v835
    %v837 = vsub.f32 1.0, %v836
    %v838 = vmul.f32 %v835, %v837
    %v839 = vadd.f32 %v835, %v838
    %vm840 = vweird.f32 %v834
    %vm841 = vweird.f32 %v835
    %vm842 = vmor %vm840, %vm841
    %v843 = vsel %vm842, %v835, %v839
    %v844 = vand.u32 2147483647, %v834
    %vm845 = vcmp.eq.f32.partialorder %v844, 8.507059e+37
    %v846 = vand.u32 %v834, 2147483648
    %v847 = vor.u32 1.1754944e-38, %v846
    %v848 = vsel %vm845, %v847, %v843
    %v849 = vmul.f32 1.0, %v848
    %v850 = vtanh.pop %v830
    %v852 = vrot.slane %v799, 6
    %v854 = vmul.f32 %v849, %v852
    %856 = vrot.lane.b32.xlu0 %v850, 64
    %v857 = vpop.permute.xlu0 %856
    %v859 = vmul.f32 %v849, %v857
    %861 = vrot.lane.b32.xlu0 %v859, 32
    %v862 = vpop.permute.xlu0 %861
    %v864 = vadd.f32 %v854, %v862
    %v865 = vtanh.pop %v864
    %867 = vrot.lane.b32.xlu0 %v865, 64
    %v868 = vpop.permute.xlu0 %867
    %v870 = vmul.f32 %v849, %v868
    %v871 = vpack.c.bf16 %v870, %v870
    %v873 = vrot.slane %v871, 2
    %874 = vrot.lane.b32.xlu0 %v873, 32
    %v875 = vpop.permute.xlu0 %874
    %v877 = vsel %vm159, %v875, 0
    %879 = vmatpush.bf16.msra.mxu0 0
    %880 = vmatpush.bf16.msra.mxu0 0
    %881 = vmatpush.bf16.msra.mxu0 0
    %882 = vmatpush.bf16.msra.mxu0 0
    %883 = vmatpush.bf16.msra.mxu0 0
    %884 = vmatpush.bf16.msra.mxu0 0
    %885 = vmatpush.bf16.msra.mxu0 %v682
    %886 = vmatpush.bf16.msra.mxu0 %v681
    %887 = vmatmul.bf16.gmra.mxu0 %v877
    %v888 = vpop.f32.mrf.mxu0
    %v889 = vadd.f32 0.0, %v888
    %v890 = vpop.f32.mrf.mxu0
    %891 = vdwg.mxu0
    %v893 = vrot.slane %v889, 2
    %v895 = vadd.f32 %v142, %v893
    %v896 = vxor.u32 %v895, 2147483648
    %v897 = vmul.f32 %v896, 1.442695
    %v898 = vpow.pop %v897
    %v899 = vadd.f32 %v898, 1.0
    %v900 = vrcp.pop %v899
    %v901 = vmul.f32 %v899, %v900
    %v902 = vsub.f32 1.0, %v901
    %v903 = vmul.f32 %v900, %v902
    %v904 = vadd.f32 %v900, %v903
    %vm905 = vweird.f32 %v899
    %vm906 = vweird.f32 %v900
    %vm907 = vmor %vm905, %vm906
    %v908 = vsel %vm907, %v900, %v904
    %v909 = vand.u32 2147483647, %v899
    %vm910 = vcmp.eq.f32.partialorder %v909, 8.507059e+37
    %v911 = vand.u32 %v899, 2147483648
    %v912 = vor.u32 1.1754944e-38, %v911
    %v913 = vsel %vm910, %v912, %v908
    %v914 = vmul.f32 1.0, %v913
    %v915 = vtanh.pop %v895
    %v917 = vrot.slane %v864, 6
    %v919 = vmul.f32 %v914, %v917
    %921 = vrot.lane.b32.xlu0 %v915, 64
    %v922 = vpop.permute.xlu0 %921
    %v924 = vmul.f32 %v914, %v922
    %926 = vrot.lane.b32.xlu0 %v924, 32
    %v927 = vpop.permute.xlu0 %926
    %v929 = vadd.f32 %v919, %v927
    %v930 = vtanh.pop %v929
    %932 = vrot.lane.b32.xlu0 %v930, 64
    %v933 = vpop.permute.xlu0 %932
    %v935 = vmul.f32 %v914, %v933
    %v936 = vpack.c.bf16 %v935, %v935
    %v938 = vrot.slane %v936, 3
    %939 = vrot.lane.b32.xlu0 %v938, 32
    %v940 = vpop.permute.xlu0 %939
    %v942 = vsel %vm159, %v940, 0
    %944 = vmatpush.bf16.msra.mxu0 0
    %945 = vmatpush.bf16.msra.mxu0 0
    %946 = vmatpush.bf16.msra.mxu0 0
    %947 = vmatpush.bf16.msra.mxu0 0
    %948 = vmatpush.bf16.msra.mxu0 0
    %949 = vmatpush.bf16.msra.mxu0 0
    %950 = vmatpush.bf16.msra.mxu0 %v682
    %951 = vmatpush.bf16.msra.mxu0 %v681
    %952 = vmatmul.bf16.gmra.mxu0 %v942
    %v953 = vpop.f32.mrf.mxu0
    %v954 = vadd.f32 0.0, %v953
    %v955 = vpop.f32.mrf.mxu0
    %956 = vdwg.mxu0
    %v957 = vadd.f32 %v144, %v954
    %v958 = vxor.u32 %v957, 2147483648
    %v959 = vmul.f32 %v958, 1.442695
    %v960 = vpow.pop %v959
    %v961 = vadd.f32 %v960, 1.0
    %v962 = vrcp.pop %v961
    %v963 = vmul.f32 %v961, %v962
    %v964 = vsub.f32 1.0, %v963
    %v965 = vmul.f32 %v962, %v964
    %v966 = vadd.f32 %v962, %v965
    %vm967 = vweird.f32 %v961
    %vm968 = vweird.f32 %v962
    %vm969 = vmor %vm967, %vm968
    %v970 = vsel %vm969, %v962, %v966
    %v971 = vand.u32 2147483647, %v961
    %vm972 = vcmp.eq.f32.partialorder %v971, 8.507059e+37
    %v973 = vand.u32 %v961, 2147483648
    %v974 = vor.u32 1.1754944e-38, %v973
    %v975 = vsel %vm972, %v974, %v970
    %v976 = vmul.f32 1.0, %v975
    %v977 = vtanh.pop %v957
    %v979 = vrot.slane %v929, 6
    %v981 = vmul.f32 %v976, %v979
    %983 = vrot.lane.b32.xlu0 %v977, 64
    %v984 = vpop.permute.xlu0 %983
    %v986 = vmul.f32 %v976, %v984
    %988 = vrot.lane.b32.xlu0 %v986, 32
    %v989 = vpop.permute.xlu0 %988
    %v991 = vadd.f32 %v981, %v989
    %v992 = vtanh.pop %v991
    %994 = vrot.lane.b32.xlu0 %v992, 64
    %v995 = vpop.permute.xlu0 %994
    %v997 = vmul.f32 %v976, %v995
    %v998 = vpack.c.bf16 %v997, %v997
    %1000 = vrot.lane.b32.xlu0 %v998, 32
    %v1001 = vpop.permute.xlu0 %1000
    %v1003 = vsel %vm159, %v1001, 0
    %1005 = vmatpush.bf16.msra.mxu0 0
    %1006 = vmatpush.bf16.msra.mxu0 0
    %1007 = vmatpush.bf16.msra.mxu0 0
    %1008 = vmatpush.bf16.msra.mxu0 0
    %1009 = vmatpush.bf16.msra.mxu0 0
    %1010 = vmatpush.bf16.msra.mxu0 0
    %1011 = vmatpush.bf16.msra.mxu0 %v682
    %1012 = vmatpush.bf16.msra.mxu0 %v681
    %1013 = vmatmul.bf16.gmra.mxu0 %v1003
    %v1014 = vpop.f32.mrf.mxu0
    %v1015 = vadd.f32 0.0, %v1014
    %v1016 = vpop.f32.mrf.mxu0
    %1017 = vdwg.mxu0
    %v1019 = vrot.slane %v1015, 6
    %v1021 = vadd.f32 %v144, %v1019
    %v1022 = vxor.u32 %v1021, 2147483648
    %v1023 = vmul.f32 %v1022, 1.442695
    %v1024 = vpow.pop %v1023
    %v1025 = vadd.f32 %v1024, 1.0
    %v1026 = vrcp.pop %v1025
    %v1027 = vmul.f32 %v1025, %v1026
    %v1028 = vsub.f32 1.0, %v1027
    %v1029 = vmul.f32 %v1026, %v1028
    %v1030 = vadd.f32 %v1026, %v1029
    %vm1031 = vweird.f32 %v1025
    %vm1032 = vweird.f32 %v1026
    %vm1033 = vmor %vm1031, %vm1032
    %v1034 = vsel %vm1033, %v1026, %v1030
    %v1035 = vand.u32 2147483647, %v1025
    %vm1036 = vcmp.eq.f32.partialorder %v1035, 8.507059e+37
    %v1037 = vand.u32 %v1025, 2147483648
    %v1038 = vor.u32 1.1754944e-38, %v1037
    %v1039 = vsel %vm1036, %v1038, %v1034
    %v1040 = vmul.f32 1.0, %v1039
    %v1041 = vtanh.pop %v1021
    %v1043 = vrot.slane %v991, 6
    %v1045 = vmul.f32 %v1040, %v1043
    %1047 = vrot.lane.b32.xlu0 %v1041, 64
    %v1048 = vpop.permute.xlu0 %1047
    %v1050 = vmul.f32 %v1040, %v1048
    %1052 = vrot.lane.b32.xlu0 %v1050, 32
    %v1053 = vpop.permute.xlu0 %1052
    %v1055 = vadd.f32 %v1045, %v1053
    %v1056 = vtanh.pop %v1055
    %1058 = vrot.lane.b32.xlu0 %v1056, 64
    %v1059 = vpop.permute.xlu0 %1058
    %v1061 = vmul.f32 %v1040, %v1059
    %v1062 = vpack.c.bf16 %v1061, %v1061
    %v1064 = vrot.slane %v1062, 1
    %1065 = vrot.lane.b32.xlu0 %v1064, 32
    %v1066 = vpop.permute.xlu0 %1065
    %v1068 = vsel %vm159, %v1066, 0
    %1070 = vmatpush.bf16.msra.mxu0 0
    %1071 = vmatpush.bf16.msra.mxu0 0
    %1072 = vmatpush.bf16.msra.mxu0 0
    %1073 = vmatpush.bf16.msra.mxu0 0
    %1074 = vmatpush.bf16.msra.mxu0 0
    %1075 = vmatpush.bf16.msra.mxu0 0
    %1076 = vmatpush.bf16.msra.mxu0 %v682
    %1077 = vmatpush.bf16.msra.mxu0 %v681
    %1078 = vmatmul.bf16.gmra.mxu0 %v1068
    %v1079 = vpop.f32.mrf.mxu0
    %v1080 = vadd.f32 0.0, %v1079
    %v1081 = vpop.f32.mrf.mxu0
    %1082 = vdwg.mxu0
    %v1084 = vrot.slane %v1080, 4
    %v1086 = vadd.f32 %v144, %v1084
    %v1087 = vxor.u32 %v1086, 2147483648
    %v1088 = vmul.f32 %v1087, 1.442695
    %v1089 = vpow.pop %v1088
    %v1090 = vadd.f32 %v1089, 1.0
    %v1091 = vrcp.pop %v1090
    %v1092 = vmul.f32 %v1090, %v1091
    %v1093 = vsub.f32 1.0, %v1092
    %v1094 = vmul.f32 %v1091, %v1093
    %v1095 = vadd.f32 %v1091, %v1094
    %vm1096 = vweird.f32 %v1090
    %vm1097 = vweird.f32 %v1091
    %vm1098 = vmor %vm1096, %vm1097
    %v1099 = vsel %vm1098, %v1091, %v1095
    %v1100 = vand.u32 2147483647, %v1090
    %vm1101 = vcmp.eq.f32.partialorder %v1100, 8.507059e+37
    %v1102 = vand.u32 %v1090, 2147483648
    %v1103 = vor.u32 1.1754944e-38, %v1102
    %v1104 = vsel %vm1101, %v1103, %v1099
    %v1105 = vmul.f32 1.0, %v1104
    %v1106 = vtanh.pop %v1086
    %v1108 = vrot.slane %v1055, 6
    %v1110 = vmul.f32 %v1105, %v1108
    %1112 = vrot.lane.b32.xlu0 %v1106, 64
    %v1113 = vpop.permute.xlu0 %1112
    %v1115 = vmul.f32 %v1105, %v1113
    %1117 = vrot.lane.b32.xlu0 %v1115, 32
    %v1118 = vpop.permute.xlu0 %1117
    %v1120 = vadd.f32 %v1110, %v1118
    %v1121 = vtanh.pop %v1120
    %1123 = vrot.lane.b32.xlu0 %v1121, 64
    %v1124 = vpop.permute.xlu0 %1123
    %v1126 = vmul.f32 %v1105, %v1124
    %v1127 = vpack.c.bf16 %v1126, %v1126
    %v1129 = vrot.slane %v1127, 2
    %1130 = vrot.lane.b32.xlu0 %v1129, 32
    %v1131 = vpop.permute.xlu0 %1130
    %v1133 = vsel %vm159, %v1131, 0
    %1135 = vmatpush.bf16.msra.mxu0 0
    %1136 = vmatpush.bf16.msra.mxu0 0
    %1137 = vmatpush.bf16.msra.mxu0 0
    %1138 = vmatpush.bf16.msra.mxu0 0
    %1139 = vmatpush.bf16.msra.mxu0 0
    %1140 = vmatpush.bf16.msra.mxu0 0
    %1141 = vmatpush.bf16.msra.mxu0 %v682
    %1142 = vmatpush.bf16.msra.mxu0 %v681
    %1143 = vmatmul.bf16.gmra.mxu0 %v1133
    %v1144 = vpop.f32.mrf.mxu0
    %v1145 = vadd.f32 0.0, %v1144
    %v1146 = vpop.f32.mrf.mxu0
    %1147 = vdwg.mxu0
    %v1149 = vrot.slane %v1145, 2
    %v1151 = vadd.f32 %v144, %v1149
    %v1152 = vxor.u32 %v1151, 2147483648
    %v1153 = vmul.f32 %v1152, 1.442695
    %v1154 = vpow.pop %v1153
    %v1155 = vadd.f32 %v1154, 1.0
    %v1156 = vrcp.pop %v1155
    %v1157 = vmul.f32 %v1155, %v1156
    %v1158 = vsub.f32 1.0, %v1157
    %v1159 = vmul.f32 %v1156, %v1158
    %v1160 = vadd.f32 %v1156, %v1159
    %vm1161 = vweird.f32 %v1155
    %vm1162 = vweird.f32 %v1156
    %vm1163 = vmor %vm1161, %vm1162
    %v1164 = vsel %vm1163, %v1156, %v1160
    %v1165 = vand.u32 2147483647, %v1155
    %vm1166 = vcmp.eq.f32.partialorder %v1165, 8.507059e+37
    %v1167 = vand.u32 %v1155, 2147483648
    %v1168 = vor.u32 1.1754944e-38, %v1167
    %v1169 = vsel %vm1166, %v1168, %v1164
    %v1170 = vmul.f32 1.0, %v1169
    %v1171 = vtanh.pop %v1151
    %v1173 = vrot.slane %v1120, 6
    %v1175 = vmul.f32 %v1170, %v1173
    %1177 = vrot.lane.b32.xlu0 %v1171, 64
    %v1178 = vpop.permute.xlu0 %1177
    %v1180 = vmul.f32 %v1170, %v1178
    %1182 = vrot.lane.b32.xlu0 %v1180, 32
    %v1183 = vpop.permute.xlu0 %1182
    %v1185 = vadd.f32 %v1175, %v1183
    %v1186 = vtanh.pop %v1185
    %1188 = vrot.lane.b32.xlu0 %v1186, 64
    %v1189 = vpop.permute.xlu0 %1188
    %v1191 = vmul.f32 %v1170, %v1189
    %v1193 = vrot.slane %v281, 1
    %v1196 = vrot.slane %v346, 2
    %v1199 = vrot.slane %v411, 3
    %v1202 = vrot.slane %v473, 4
    %v1205 = vrot.slane %v537, 5
    %v1208 = vrot.slane %v602, 6
    %v1211 = vrot.slane %v667, 7
    %v1214 = vrot.slane %v217, 1
    %v1216 = vrot.slane %v281, 2
    %v1218 = vrot.slane %v346, 3
    %v1220 = vrot.slane %v411, 4
    %v1222 = vrot.slane %v473, 5
    %v1224 = vrot.slane %v537, 6
    %v1226 = vrot.slane %v602, 7
    %vm1228 = vcmask 1040384
    %v1229 = vsel %vm1228, %v217, %v1193
    %vm1230 = vcmask 1041408
    %v1231 = vsel %vm1230, %v1229, %v1196
    %vm1232 = vcmask 1042432
    %v1233 = vsel %vm1232, %v1231, %v1199
    %v1234 = vsel %vm102, %v1233, %v1202
    %vm1235 = vcmask 1044480
    %v1236 = vsel %vm1235, %v1234, %v1205
    %vm1237 = vcmask 1045504
    %v1238 = vsel %vm1237, %v1236, %v1208
    %vm1239 = vcmask 1046528
    %v1240 = vsel %vm1239, %v1238, %v1211
    %v1241 = vsel %vm1228, %v1214, %v1216
    %v1242 = vsel %vm1230, %v1241, %v1218
    %v1243 = vsel %vm1232, %v1242, %v1220
    %v1244 = vsel %vm102, %v1243, %v1222
    %v1245 = vsel %vm1235, %v1244, %v1224
    %v1246 = vsel %vm1237, %v1245, %v1226
    %v1247 = vsel %vm1239, %v1246, %v667
    %v1249 = vrot.slane %v805, 1
    %v1252 = vrot.slane %v870, 2
    %v1255 = vrot.slane %v935, 3
    %v1258 = vrot.slane %v997, 4
    %v1261 = vrot.slane %v1061, 5
    %v1264 = vrot.slane %v1126, 6
    %v1267 = vrot.slane %v1191, 7
    %v1270 = vrot.slane %v741, 1
    %v1272 = vrot.slane %v805, 2
    %v1274 = vrot.slane %v870, 3
    %v1276 = vrot.slane %v935, 4
    %v1278 = vrot.slane %v997, 5
    %v1280 = vrot.slane %v1061, 6
    %v1282 = vrot.slane %v1126, 7
    %v1284 = vsel %vm1228, %v741, %v1249
    %v1285 = vsel %vm1230, %v1284, %v1252
    %v1286 = vsel %vm1232, %v1285, %v1255
    %v1287 = vsel %vm102, %v1286, %v1258
    %v1288 = vsel %vm1235, %v1287, %v1261
    %v1289 = vsel %vm1237, %v1288, %v1264
    %v1290 = vsel %vm1239, %v1289, %v1267
    %v1291 = vsel %vm1228, %v1270, %v1272
    %v1292 = vsel %vm1230, %v1291, %v1274
    %v1293 = vsel %vm1232, %v1292, %v1276
    %v1294 = vsel %vm102, %v1293, %v1278
    %v1295 = vsel %vm1235, %v1294, %v1280
    %v1296 = vsel %vm1237, %v1295, %v1282
    %v1297 = vsel %vm1239, %v1296, %v1191
    %v1298 = vpack.c.bf16 %v1247, %v1240
    %v1299 = vld [vmem:[%s2] sm:$0xf]
    %v1300 = vld [vmem:[%s2 + $0x4] sm:$0xf]
    %v1301 = vld [vmem:[%s2 + $0x8] sm:$0xf]
    %v1302 = vld [vmem:[%s2 + $0xc] sm:$0xf]
    %v1303 = vperm.slane %v82, 0
    %1305 = vrot.lane.b32.xlu0 %v1298, 32
    %v1306 = vpop.permute.xlu0 %1305
    %v1311 = vunpack.c.l.b16 %v1299
    %v1312 = vunpack.c.l.b16 %v1300
    %v1313 = vunpack.c.l.b16 %v1301
    %v1314 = vunpack.c.l.b16 %v1302
    %v1315 = vpack.c.b16 %v1312, %v1311
    %v1316 = vpack.c.b16 %v1314, %v1313
    %v1320 = vsel %vm159, %v1306, 0
    %1322 = vmatpush.bf16.msra.mxu0 0
    %1323 = vmatpush.bf16.msra.mxu0 0
    %1324 = vmatpush.bf16.msra.mxu0 0
    %1325 = vmatpush.bf16.msra.mxu0 0
    %1326 = vmatpush.bf16.msra.mxu0 0
    %1327 = vmatpush.bf16.msra.mxu0 0
    %1328 = vmatpush.bf16.msra.mxu0 %v1316
    %1329 = vmatpush.bf16.msra.mxu0 %v1315
    %1330 = vmatmul.bf16.gmra.mxu0 %v1320
    %v1331 = vpop.f32.mrf.mxu0
    %v1332 = vadd.f32 %v1303, %v1331
    %v1333 = vpop.f32.mrf.mxu0
    %v1334 = vadd.f32 %v1303, %v1333
    %1335 = vdwg.mxu0
    %v1336 = vpack.c.bf16 %v1332, %v1332
    %v1337 = vpack.c.bf16 %v1334, %v1334
    %v1338 = vpack.c.bf16 %v1290, %v1290
    %v1339 = vpack.c.bf16 %v1297, %v1297
    %v1340 = vlaneseq
    %v1341 = vshrl.u32 %v1340, 7
    %v1342 = vlaneseq
    %v1343 = vand.u32 %v1342, 127
    %v1344 = vmul.u32 %v1343, 2
    %vm1345 = vcmp.ge.s32.totalorder %v1341, %v1344
    %v1346 = vadd.s32 %v1343, 1
    %v1347 = vmul.u32 %v1346, 2
    %vm1348 = vcmp.lt.s32.totalorder %v1341, %v1347
    %vm1349 = vmand %vm1345, %vm1348
    %v1350 = vsel %vm1349, 1, 0
    %v1351 = vcvt.s32.f32 %v1350
    %v1353 = vunpack.c.l.b16 %v1338
    %v1354 = vpack.c.b16 %v1353, %v1353
    %1355 = vrot.lane.b32.xlu0 %v1354, 32
    %v1356 = vpop.permute.xlu0 %1355
    %v1358 = vsel %vm159, %v1356, 0
    %v1361 = vsel %vm159, %v1336, 0
    %1363 = vmatpush.bf16.xpose.msra.mxu0 0
    %1364 = vmatpush.bf16.xpose.msra.mxu0 0
    %1365 = vmatpush.bf16.xpose.msra.mxu0 0
    %1366 = vmatpush.bf16.xpose.msra.mxu0 0
    %1367 = vmatpush.bf16.xpose.msra.mxu0 0
    %1368 = vmatpush.bf16.xpose.msra.mxu0 0
    %1369 = vmatpush.bf16.xpose.msra.mxu0 0
    %1370 = vmatpush.bf16.xpose.msra.mxu0 %v1361
    %1371 = vmatmul.bf16.gmra.mxu0 %v1358
    %v1372 = vpop.f32.mrf.mxu0
    %v1373 = vadd.f32 0.0, %v1372
    %v1374 = vpop.f32.mrf.mxu0
    %1375 = vdwg.mxu0
    %v1376 = vsel %vm98, %v1373, -inf
    %1377 = vmax.xlane.f32.xlu0 %v1376
    %v1378 = vpop.xlane.xlu0 %1377
    %v1379 = vsub.f32 %v1373, %v1378
    %v1380 = vmul.f32 %v1379, 1.442695
    %v1381 = vpow.pop %v1380
    %v1382 = vsel %vm98, %v1381, 0.0
    %1383 = vadd.xlane.f32.xlu0 %v1382
    %v1384 = vpop.xlane.xlu0 %1383
    %v1385 = vrcp.pop %v1384
    %v1386 = vmul.f32 %v1381, %v1385
    %v1387 = vpack.c.bf16 %v1386, %v1386
    %v1389 = vsel %vm98, %v1387, 0
    %v1391 = vsel %vm102, %v1336, 0
    %1393 = vmatpush.bf16.msra.mxu0 0
    %1394 = vmatpush.bf16.msra.mxu0 0
    %1395 = vmatpush.bf16.msra.mxu0 0
    %1396 = vmatpush.bf16.msra.mxu0 0
    %1397 = vmatpush.bf16.msra.mxu0 0
    %1398 = vmatpush.bf16.msra.mxu0 0
    %1399 = vmatpush.bf16.msra.mxu0 0
    %1400 = vmatpush.bf16.msra.mxu0 %v1391
    %1401 = vmatmul.bf16.gmra.mxu0 %v1389
    %v1402 = vpop.f32.mrf.mxu0
    %v1403 = vadd.f32 0.0, %v1402
    %v1404 = vpop.f32.mrf.mxu0
    %1405 = vdwg.mxu0
    %1407 = vrot.lane.b32.xlu0 %v86, 96
    %v1408 = vpop.permute.xlu0 %1407
    %v1410 = vmul.f32 %v1290, %v1408
    %v1411 = vmul.f32 %v1403, %v87
    %1413 = vrot.lane.b32.xlu0 %v1411, 96
    %v1414 = vpop.permute.xlu0 %1413
    %v1416 = vadd.f32 %v1410, %v1414
    %1418 = vrot.lane.b32.xlu0 %v1416, 32
    %v1419 = vpop.permute.xlu0 %1418
    %v1421 = vsel %vm159, %v1419, 0.0
    %1422 = vadd.xlane.f32.xlu0 %v1421
    %v1423 = vpop.xlane.xlu0 %1422
    %v1424 = vmul.f32 %v1423, %v1351
    %vm1425 = vcmask 31744
    %v1426 = vsel %vm1425, %v1424, 0.0
    %v1427 = vrot.slane %v1426, 4
    %v1428 = vadd.f32 %v1426, %v1427
    %v1429 = vrot.slane %v1428, 2
    %v1430 = vadd.f32 %v1428, %v1429
    %v1431 = vrot.slane %v1430, 1
    %v1432 = vadd.f32 %v1430, %v1431
    %v1434 = vunpack.c.l.b16 %v1339
    %v1435 = vpack.c.b16 %v1434, %v1434
    %1436 = vrot.lane.b32.xlu0 %v1435, 32
    %v1437 = vpop.permute.xlu0 %1436
    %v1439 = vsel %vm159, %v1437, 0
    %v1442 = vsel %vm159, %v1337, 0
    %1444 = vmatpush.bf16.xpose.msra.mxu0 0
    %1445 = vmatpush.bf16.xpose.msra.mxu0 0
    %1446 = vmatpush.bf16.xpose.msra.mxu0 0
    %1447 = vmatpush.bf16.xpose.msra.mxu0 0
    %1448 = vmatpush.bf16.xpose.msra.mxu0 0
    %1449 = vmatpush.bf16.xpose.msra.mxu0 0
    %1450 = vmatpush.bf16.xpose.msra.mxu0 0
    %1451 = vmatpush.bf16.xpose.msra.mxu0 %v1442
    %1452 = vmatmul.bf16.gmra.mxu0 %v1439
    %v1453 = vpop.f32.mrf.mxu0
    %v1454 = vadd.f32 0.0, %v1453
    %v1455 = vpop.f32.mrf.mxu0
    %1456 = vdwg.mxu0
    %v1457 = vsel %vm98, %v1454, -inf
    %1458 = vmax.xlane.f32.xlu0 %v1457
    %v1459 = vpop.xlane.xlu0 %1458
    %v1460 = vsub.f32 %v1454, %v1459
    %v1461 = vmul.f32 %v1460, 1.442695
    %v1462 = vpow.pop %v1461
    %v1463 = vsel %vm98, %v1462, 0.0
    %1464 = vadd.xlane.f32.xlu0 %v1463
    %v1465 = vpop.xlane.xlu0 %1464
    %v1466 = vrcp.pop %v1465
    %v1467 = vmul.f32 %v1462, %v1466
    %v1468 = vpack.c.bf16 %v1467, %v1467
    %v1470 = vsel %vm98, %v1468, 0
    %v1472 = vsel %vm102, %v1337, 0
    %1474 = vmatpush.bf16.msra.mxu0 0
    %1475 = vmatpush.bf16.msra.mxu0 0
    %1476 = vmatpush.bf16.msra.mxu0 0
    %1477 = vmatpush.bf16.msra.mxu0 0
    %1478 = vmatpush.bf16.msra.mxu0 0
    %1479 = vmatpush.bf16.msra.mxu0 0
    %1480 = vmatpush.bf16.msra.mxu0 0
    %1481 = vmatpush.bf16.msra.mxu0 %v1472
    %1482 = vmatmul.bf16.gmra.mxu0 %v1470
    %v1483 = vpop.f32.mrf.mxu0
    %v1484 = vadd.f32 0.0, %v1483
    %v1485 = vpop.f32.mrf.mxu0
    %1486 = vdwg.mxu0
    %v1487 = vmul.f32 %v1297, %v1408
    %v1488 = vmul.f32 %v1484, %v87
    %1490 = vrot.lane.b32.xlu0 %v1488, 96
    %v1491 = vpop.permute.xlu0 %1490
    %v1493 = vadd.f32 %v1487, %v1491
    %1495 = vrot.lane.b32.xlu0 %v1493, 32
    %v1496 = vpop.permute.xlu0 %1495
    %v1498 = vsel %vm159, %v1496, 0.0
    %1499 = vadd.xlane.f32.xlu0 %v1498
    %v1500 = vpop.xlane.xlu0 %1499
    %v1501 = vmul.f32 %v1500, %v1351
    %v1502 = vsel %vm1425, %v1501, 0.0
    %v1503 = vrot.slane %v1502, 4
    %v1504 = vadd.f32 %v1502, %v1503
    %v1505 = vrot.slane %v1504, 2
    %v1506 = vadd.f32 %v1504, %v1505
    %v1507 = vrot.slane %v1506, 1
    %v1508 = vadd.f32 %v1506, %v1507
    %1510 = vrot.lane.b32.xlu0 %v1508, 4
    %v1511 = vpop.permute.xlu0 %1510
    %v1513 = vsel %vm1425, %v1432, %v1511
    %1515 = vset.pattern.permute.xlu0 0
    %1516 = vperm.xlu0 %1515, %v83
    %v1517 = vpop.permute.xlu0 %1516
    %v1519 = vadd.f32 %v1513, %v1517
    %vm1520 = vcmask 57344
    %1521 = vst.msk [vmem:[#allocation8] sm:$0x1] %vm1520, %v1519
    // Predicated region
    $region38: #{tpu_custom_call.1} parent=1 // pred_check
      _
    $region39: #{tpu_custom_call.1} parent=1 // pred_check_branch
      %1523 = sbr.rel (0) target = $region41
    $region40: #{tpu_custom_call.1} parent=1 // pred_region
      %1525 = vsyncadd [#allocation4], 0
      %s1527 = sshll.u32 [#allocation8], 4
      %s1528 = int_to_ptr.vmem [resolvable:$true] %s1527
      %s1529 = sshll.u32 %s6, 4
      %s1530 = int_to_ptr.hbm [resolvable:$true] %s1529
      %1532 = dma.vmem_to_hbm [thread:$0]  %s1528, 16, %s1530, [#allocation4]
    $region41: #{tpu_custom_call.1} parent=1 // pred_fallthru
      _
    // Predicated region
    $region42: #{tpu_custom_call.1} parent=1 // pred_check
      _
    $region43: #{tpu_custom_call.1} parent=1 // pred_check_branch
      %1534 = sbr.rel (0) target = $region45
    $region44: #{tpu_custom_call.1} parent=1 // pred_region
      %1536 = dma.done [#allocation4], 16
    $region45: #{tpu_custom_call.1} parent=1 // pred_fallthru
      _
    %1537 = vsyncpa [#allocation3], 1
    %1538 = vsyncpa [#allocation6], 1
    %1539 = vsyncpa [#allocation4], 1

</llo_original>
